<compile_context>
chip_gen: v5e
topology: v5e:2x2
jax: 0.10.0
libtpu: 0.0.40
codegen_flags: <defaults>
</compile_context>

<pallas_src>
import jax
import jax.numpy as jnp
from jax import lax
from jax.experimental import pallas as pl
from jax.experimental.pallas import tpu as pltpu


# ------------------------------ Pallas kernel -------------------------------

def _conv_mnist_kernel(x_ref, k1_ref, b1_ref, sh1_ref, sw1_ref,
                       k2_ref, b2_ref, wc_ref, bl_ref, o_ref):
    """Whole ConvMnist forward for a small batch, fully VMEM-resident.

    x_ref : (N, 28, 28)        input images (C=1 squeezed)
    k1_ref: (5, 28, 240)       conv1 banded weights, lanes = ow*10 + oc
    b1_ref: (1, 240)           conv1 bias tiled over ow
    sh1_ref: (12, 23)          pool1 row (stride-2) 0/1 compaction
    sw1_ref: (230, 120)        pool1 lane (stride-2) 0/1 compaction
    k2_ref: (5, 120, 160)      conv2 banded weights, lanes = ow*20 + oc
    b2_ref: (1, 160)           conv2 bias tiled over ow
    wc_ref: (4, 140, 10)       linear weights with pool2 lane compaction folded
    bl_ref: (1, 10)            linear bias
    o_ref : (N, 10)            logits
    """
    f32 = jnp.float32
    outs = []
    for n in range(x_ref.shape[0]):                      # unrolled over batch
        x = x_ref[n]                                     # (28, 28)

        # conv1 (1->10, 5x5) + ReLU : rows = oh (24), lanes = ow*10+oc (240)
        acc1 = jnp.dot(x[0:24, :], k1_ref[0], preferred_element_type=f32)
        for i in range(1, 5):
            acc1 = acc1 + jnp.dot(x[i:i + 24, :], k1_ref[i],
                                  preferred_element_type=f32)
        a1 = jnp.maximum(acc1 + b1_ref[...], 0.0)        # (24, 240)

        # 2x2 maxpool: pairwise maxes + 0/1-matmul stride-2 compaction
        t1 = jnp.maximum(a1[0:23, :], a1[1:24, :])                     # (23,240)
        hm1 = jnp.dot(sh1_ref[...], t1, preferred_element_type=f32)    # (12,240)
        t1w = jnp.maximum(hm1[:, 0:230], hm1[:, 10:240])               # (12,230)
        p1 = jnp.dot(t1w, sw1_ref[...], preferred_element_type=f32)    # (12,120)

        # conv2 (10->20, 5x5) + ReLU : rows = oh (8), lanes = ow*20+oc (160)
        acc2 = jnp.dot(p1[0:8, :], k2_ref[0], preferred_element_type=f32)
        for i in range(1, 5):
            acc2 = acc2 + jnp.dot(p1[i:i + 8, :], k2_ref[i],
                                  preferred_element_type=f32)
        a2 = jnp.maximum(acc2 + b2_ref[...], 0.0)        # (8, 160)

        # 2x2 maxpool pairwise maxes (stride-2 compaction folded into wc)
        t2 = jnp.maximum(a2[0:7, :], a2[1:8, :])         # (7, 160)
        t2w = jnp.maximum(t2[:, 0:140], t2[:, 20:160])   # (7, 140)

        # Flatten + Dropout(identity, eval) + Linear(320, 10)
        out = bl_ref[...]                                # (1, 10)
        for h in range(4):
            out = out + jnp.dot(t2w[2 * h:2 * h + 1, :], wc_ref[h],
                                preferred_element_type=f32)
        outs.append(out)

    o_ref[...] = jnp.concatenate(outs, axis=0)           # (N, 10)


# ------------------------------ host wrappers --------------------------------

def prepare_params(params):
    """One-time (outside the hot path) conversion of PyTorch-layout weights
    into the kernel's banded / lane-packed matrices."""
    w1, b1, w2, b2, wl, bl = params
    f32 = jnp.float32

    # conv1 band: K1[i, w, ow*10 + oc] = w1[oc, 0, i, w - ow]  (0 <= w-ow < 5)
    k1 = jnp.zeros((5, 28, 24, 10), f32)
    ow = jnp.arange(24)
    for i in range(5):
        for j in range(5):
            k1 = k1.at[i, ow + j, ow, :].set(w1[:, 0, i, j])
    k1 = k1.reshape(5, 28, 240)
    b1t = jnp.tile(b1, 24).reshape(1, 240)

    # pool1 row compaction  Sh1[k, 2k] = 1
    sh1 = jnp.zeros((12, 23), f32).at[jnp.arange(12),
                                      2 * jnp.arange(12)].set(1.0)
    # pool1 lane compaction Sw1[2m*10 + c, m*10 + c] = 1
    m = jnp.arange(12)[:, None]
    c = jnp.arange(10)[None, :]
    sw1 = jnp.zeros((230, 120), f32).at[(2 * m * 10 + c).ravel(),
                                        (m * 10 + c).ravel()].set(1.0)

    # conv2 band: K2[i, ow1*10 + c, ow2*20 + oc] = w2[oc, c, i, ow1 - ow2]
    k2 = jnp.zeros((5, 12, 10, 8, 20), f32)
    ow2 = jnp.arange(8)
    for i in range(5):
        for j in range(5):
            k2 = k2.at[i, ow2 + j, :, ow2, :].set(w2[:, :, i, j].T)
    k2 = k2.reshape(5, 120, 160)
    b2t = jnp.tile(b2, 8).reshape(1, 160)

    # linear with pool2 lane compaction folded in:
    # WC[h, ow*20 + oc, o] = wl[o, oc*16 + h*4 + ow//2]  for even ow, else 0
    wlr = wl.reshape(10, 20, 4, 4)                    # [o, oc, h, w]
    wc = jnp.zeros((4, 8, 20, 10), f32)
    for h in range(4):
        for w in range(4):
            wc = wc.at[h, 2 * w, :, :].set(wlr[:, :, h, w].T)
    wc = wc.reshape(4, 160, 10)[:, :140, :]
    blr = bl.reshape(1, 10)
    return k1, b1t, sh1, sw1, k2, b2t, wc, blr


def conv_mnist_forward(x, prep):
    """x: (N, 1, 28, 28) float32 -> logits (N, 10)."""
    k1, b1t, sh1, sw1, k2, b2t, wc, blr = prep
    n = x.shape[0]
    x2 = x.reshape(n, 28, 28)        # metadata-only squeeze of the C=1 dim
    vmem = pl.BlockSpec(memory_space=pltpu.MemorySpace.VMEM)
    return pl.pallas_call(
        _conv_mnist_kernel,
        out_shape=jax.ShapeDtypeStruct((n, 10), jnp.float32),
        in_specs=[vmem] * 9,
        out_specs=vmem,
    )(x2, k1, b1t, sh1, sw1, k2, b2t, wc, blr)


# -------------------------- params / reference ------------------------------

def init_params(key):
    ks = jax.random.split(key, 6)

    def u(k, shape, fan_in):
        bound = 1.0 / jnp.sqrt(jnp.float32(fan_in))
        return jax.random.uniform(k, shape, jnp.float32, -bound, bound)

    w1 = u(ks[0], (10, 1, 5, 5), 1 * 5 * 5)
    b1 = u(ks[1], (10,), 1 * 5 * 5)
    w2 = u(ks[2], (20, 10, 5, 5), 10 * 5 * 5)
    b2 = u(ks[3], (20,), 10 * 5 * 5)
    wl = u(ks[4], (10, 4 * 4 * 20), 4 * 4 * 20)
    bl = u(ks[5], (10,), 4 * 4 * 20)
    return w1, b1, w2, b2, wl, bl


def reference_forward(x, params):
    # Pure-JAX reference of the same forward pass (correctness check).
    w1, b1, w2, b2, wl, bl = params

    def conv(x, w, b):
        y = lax.conv_general_dilated(
            x, w, (1, 1), "VALID", dimension_numbers=("NCHW", "OIHW", "NCHW"))
        return y + b[None, :, None, None]

    def pool(x):
        return lax.reduce_window(x, -jnp.inf, lax.max,
                                 (1, 1, 2, 2), (1, 1, 2, 2), "VALID")

    x = pool(jax.nn.relu(conv(x, w1, b1)))
    x = pool(jax.nn.relu(conv(x, w2, b2)))
    x = x.reshape(x.shape[0], -1)
    return x @ wl.T + bl


# --------------------------------- main --------------------------------------

if __name__ == "__main__":
    key = jax.random.PRNGKey(0)
    kx, kp = jax.random.split(key)
    # ConvMnist's Linear(4*4*20, 10) pins the input to 1x28x28 (MNIST); batch=2.
    x = jax.random.normal(kx, (2, 1, 28, 28), jnp.float32)
    params = init_params(kp)
    prep = prepare_params(params)            # one-time weight repacking

    out = jax.block_until_ready(jax.jit(conv_mnist_forward)(x, prep))
    ref = reference_forward(x, params)

    assert out.shape == (2, 10), out.shape
    # 1e-2 tolerance is kept to stay robust to MXU default-precision
    # differences between the Pallas dots and XLA's reference conv.
    assert jnp.allclose(out, ref, rtol=1e-2, atol=1e-2), (out, ref)
    print("KERNEL_OK")
</pallas_src>

<mosaic_0001>
module attributes {stable_mosaic.version = 11 : i64} {
  func.func @_conv_mnist_kernel(%arg0: memref<2x28x28xf32, #tpu.memory_space<vmem>>, %arg1: memref<5x28x240xf32, #tpu.memory_space<vmem>>, %arg2: memref<1x240xf32, #tpu.memory_space<vmem>>, %arg3: memref<12x23xf32, #tpu.memory_space<vmem>>, %arg4: memref<230x120xf32, #tpu.memory_space<vmem>>, %arg5: memref<5x120x160xf32, #tpu.memory_space<vmem>>, %arg6: memref<1x160xf32, #tpu.memory_space<vmem>>, %arg7: memref<4x140x10xf32, #tpu.memory_space<vmem>>, %arg8: memref<1x10xf32, #tpu.memory_space<vmem>>, %arg9: memref<2x10xf32, #tpu.memory_space<vmem>>) attributes {dimension_semantics = [], scalar_prefetch = 0 : i64, scratch_operands = 0 : i64, tpu.core_type = #tpu.core_type<tc>} {
    %c0 = arith.constant 0 : index
    %c0_0 = arith.constant 0 : index
    %c0_1 = arith.constant 0 : index
    %0 = vector.load %arg0[%c0, %c0_0, %c0_1] : memref<2x28x28xf32, #tpu.memory_space<vmem>>, vector<1x28x28xf32>
    %1 = vector.shape_cast %0 : vector<1x28x28xf32> to vector<28x28xf32>
    %2 = vector.extract_strided_slice %1 {offsets = [0, 0], sizes = [24, 28], strides = [1, 1]} : vector<28x28xf32> to vector<24x28xf32>
    %c0_2 = arith.constant 0 : index
    %c0_3 = arith.constant 0 : index
    %c0_4 = arith.constant 0 : index
    %3 = vector.load %arg1[%c0_2, %c0_3, %c0_4] : memref<5x28x240xf32, #tpu.memory_space<vmem>>, vector<1x28x240xf32>
    %4 = vector.shape_cast %3 : vector<1x28x240xf32> to vector<28x240xf32>
    %cst = arith.constant dense<0.000000e+00> : vector<24x240xf32>
    %5 = tpu.matmul %2, %4, %cst {dimension_numbers = #tpu.dot_dimension_numbers<[1], [0], [0], [1], [0, 0, 1, 1], [], []>} : vector<24x28xf32>, vector<28x240xf32>, vector<24x240xf32> -> vector<24x240xf32>
    %6 = vector.extract_strided_slice %1 {offsets = [1, 0], sizes = [24, 28], strides = [1, 1]} : vector<28x28xf32> to vector<24x28xf32>
    %c1 = arith.constant 1 : index
    %c0_5 = arith.constant 0 : index
    %c0_6 = arith.constant 0 : index
    %7 = vector.load %arg1[%c1, %c0_5, %c0_6] : memref<5x28x240xf32, #tpu.memory_space<vmem>>, vector<1x28x240xf32>
    %8 = vector.shape_cast %7 : vector<1x28x240xf32> to vector<28x240xf32>
    %cst_7 = arith.constant dense<0.000000e+00> : vector<24x240xf32>
    %9 = tpu.matmul %6, %8, %cst_7 {dimension_numbers = #tpu.dot_dimension_numbers<[1], [0], [0], [1], [0, 0, 1, 1], [], []>} : vector<24x28xf32>, vector<28x240xf32>, vector<24x240xf32> -> vector<24x240xf32>
    %10 = arith.addf %5, %9 : vector<24x240xf32>
    %11 = vector.extract_strided_slice %1 {offsets = [2, 0], sizes = [24, 28], strides = [1, 1]} : vector<28x28xf32> to vector<24x28xf32>
    %c2 = arith.constant 2 : index
    %c0_8 = arith.constant 0 : index
    %c0_9 = arith.constant 0 : index
    %12 = vector.load %arg1[%c2, %c0_8, %c0_9] : memref<5x28x240xf32, #tpu.memory_space<vmem>>, vector<1x28x240xf32>
    %13 = vector.shape_cast %12 : vector<1x28x240xf32> to vector<28x240xf32>
    %cst_10 = arith.constant dense<0.000000e+00> : vector<24x240xf32>
    %14 = tpu.matmul %11, %13, %cst_10 {dimension_numbers = #tpu.dot_dimension_numbers<[1], [0], [0], [1], [0, 0, 1, 1], [], []>} : vector<24x28xf32>, vector<28x240xf32>, vector<24x240xf32> -> vector<24x240xf32>
    %15 = arith.addf %10, %14 : vector<24x240xf32>
    %16 = vector.extract_strided_slice %1 {offsets = [3, 0], sizes = [24, 28], strides = [1, 1]} : vector<28x28xf32> to vector<24x28xf32>
    %c3 = arith.constant 3 : index
    %c0_11 = arith.constant 0 : index
    %c0_12 = arith.constant 0 : index
    %17 = vector.load %arg1[%c3, %c0_11, %c0_12] : memref<5x28x240xf32, #tpu.memory_space<vmem>>, vector<1x28x240xf32>
    %18 = vector.shape_cast %17 : vector<1x28x240xf32> to vector<28x240xf32>
    %cst_13 = arith.constant dense<0.000000e+00> : vector<24x240xf32>
    %19 = tpu.matmul %16, %18, %cst_13 {dimension_numbers = #tpu.dot_dimension_numbers<[1], [0], [0], [1], [0, 0, 1, 1], [], []>} : vector<24x28xf32>, vector<28x240xf32>, vector<24x240xf32> -> vector<24x240xf32>
    %20 = arith.addf %15, %19 : vector<24x240xf32>
    %21 = vector.extract_strided_slice %1 {offsets = [4, 0], sizes = [24, 28], strides = [1, 1]} : vector<28x28xf32> to vector<24x28xf32>
    %c4 = arith.constant 4 : index
    %c0_14 = arith.constant 0 : index
    %c0_15 = arith.constant 0 : index
    %22 = vector.load %arg1[%c4, %c0_14, %c0_15] : memref<5x28x240xf32, #tpu.memory_space<vmem>>, vector<1x28x240xf32>
    %23 = vector.shape_cast %22 : vector<1x28x240xf32> to vector<28x240xf32>
    %cst_16 = arith.constant dense<0.000000e+00> : vector<24x240xf32>
    %24 = tpu.matmul %21, %23, %cst_16 {dimension_numbers = #tpu.dot_dimension_numbers<[1], [0], [0], [1], [0, 0, 1, 1], [], []>} : vector<24x28xf32>, vector<28x240xf32>, vector<24x240xf32> -> vector<24x240xf32>
    %25 = arith.addf %20, %24 : vector<24x240xf32>
    %c0_17 = arith.constant 0 : index
    %c0_18 = arith.constant 0 : index
    %26 = vector.load %arg2[%c0_17, %c0_18] : memref<1x240xf32, #tpu.memory_space<vmem>>, vector<1x240xf32>
    %27 = vector.broadcast %26 : vector<1x240xf32> to vector<24x240xf32>
    %28 = arith.addf %25, %27 : vector<24x240xf32>
    %cst_19 = arith.constant 0.000000e+00 : f32
    %29 = vector.broadcast %cst_19 : f32 to vector<24x240xf32>
    %30 = arith.maximumf %28, %29 : vector<24x240xf32>
    %31 = vector.extract_strided_slice %30 {offsets = [0, 0], sizes = [23, 240], strides = [1, 1]} : vector<24x240xf32> to vector<23x240xf32>
    %32 = vector.extract_strided_slice %30 {offsets = [1, 0], sizes = [23, 240], strides = [1, 1]} : vector<24x240xf32> to vector<23x240xf32>
    %33 = arith.maximumf %31, %32 : vector<23x240xf32>
    %c0_20 = arith.constant 0 : index
    %c0_21 = arith.constant 0 : index
    %34 = vector.load %arg3[%c0_20, %c0_21] : memref<12x23xf32, #tpu.memory_space<vmem>>, vector<12x23xf32>
    %cst_22 = arith.constant dense<0.000000e+00> : vector<12x240xf32>
    %35 = tpu.matmul %34, %33, %cst_22 {dimension_numbers = #tpu.dot_dimension_numbers<[1], [0], [0], [1], [0, 0, 1, 1], [], []>} : vector<12x23xf32>, vector<23x240xf32>, vector<12x240xf32> -> vector<12x240xf32>
    %36 = vector.extract_strided_slice %35 {offsets = [0, 0], sizes = [12, 230], strides = [1, 1]} : vector<12x240xf32> to vector<12x230xf32>
    %37 = vector.extract_strided_slice %35 {offsets = [0, 10], sizes = [12, 230], strides = [1, 1]} : vector<12x240xf32> to vector<12x230xf32>
    %38 = arith.maximumf %36, %37 : vector<12x230xf32>
    %c0_23 = arith.constant 0 : index
    %c0_24 = arith.constant 0 : index
    %39 = vector.load %arg4[%c0_23, %c0_24] : memref<230x120xf32, #tpu.memory_space<vmem>>, vector<230x120xf32>
    %cst_25 = arith.constant dense<0.000000e+00> : vector<12x120xf32>
    %40 = tpu.matmul %38, %39, %cst_25 {dimension_numbers = #tpu.dot_dimension_numbers<[1], [0], [0], [1], [0, 0, 1, 1], [], []>} : vector<12x230xf32>, vector<230x120xf32>, vector<12x120xf32> -> vector<12x120xf32>
    %41 = vector.extract_strided_slice %40 {offsets = [0, 0], sizes = [8, 120], strides = [1, 1]} : vector<12x120xf32> to vector<8x120xf32>
    %c0_26 = arith.constant 0 : index
    %c0_27 = arith.constant 0 : index
    %c0_28 = arith.constant 0 : index
    %42 = vector.load %arg5[%c0_26, %c0_27, %c0_28] : memref<5x120x160xf32, #tpu.memory_space<vmem>>, vector<1x120x160xf32>
    %43 = vector.shape_cast %42 : vector<1x120x160xf32> to vector<120x160xf32>
    %cst_29 = arith.constant dense<0.000000e+00> : vector<8x160xf32>
    %44 = tpu.matmul %41, %43, %cst_29 {dimension_numbers = #tpu.dot_dimension_numbers<[1], [0], [0], [1], [0, 0, 1, 1], [], []>} : vector<8x120xf32>, vector<120x160xf32>, vector<8x160xf32> -> vector<8x160xf32>
    %45 = vector.extract_strided_slice %40 {offsets = [1, 0], sizes = [8, 120], strides = [1, 1]} : vector<12x120xf32> to vector<8x120xf32>
    %c1_30 = arith.constant 1 : index
    %c0_31 = arith.constant 0 : index
    %c0_32 = arith.constant 0 : index
    %46 = vector.load %arg5[%c1_30, %c0_31, %c0_32] : memref<5x120x160xf32, #tpu.memory_space<vmem>>, vector<1x120x160xf32>
    %47 = vector.shape_cast %46 : vector<1x120x160xf32> to vector<120x160xf32>
    %cst_33 = arith.constant dense<0.000000e+00> : vector<8x160xf32>
    %48 = tpu.matmul %45, %47, %cst_33 {dimension_numbers = #tpu.dot_dimension_numbers<[1], [0], [0], [1], [0, 0, 1, 1], [], []>} : vector<8x120xf32>, vector<120x160xf32>, vector<8x160xf32> -> vector<8x160xf32>
    %49 = arith.addf %44, %48 : vector<8x160xf32>
    %50 = vector.extract_strided_slice %40 {offsets = [2, 0], sizes = [8, 120], strides = [1, 1]} : vector<12x120xf32> to vector<8x120xf32>
    %c2_34 = arith.constant 2 : index
    %c0_35 = arith.constant 0 : index
    %c0_36 = arith.constant 0 : index
    %51 = vector.load %arg5[%c2_34, %c0_35, %c0_36] : memref<5x120x160xf32, #tpu.memory_space<vmem>>, vector<1x120x160xf32>
    %52 = vector.shape_cast %51 : vector<1x120x160xf32> to vector<120x160xf32>
    %cst_37 = arith.constant dense<0.000000e+00> : vector<8x160xf32>
    %53 = tpu.matmul %50, %52, %cst_37 {dimension_numbers = #tpu.dot_dimension_numbers<[1], [0], [0], [1], [0, 0, 1, 1], [], []>} : vector<8x120xf32>, vector<120x160xf32>, vector<8x160xf32> -> vector<8x160xf32>
    %54 = arith.addf %49, %53 : vector<8x160xf32>
    %55 = vector.extract_strided_slice %40 {offsets = [3, 0], sizes = [8, 120], strides = [1, 1]} : vector<12x120xf32> to vector<8x120xf32>
    %c3_38 = arith.constant 3 : index
    %c0_39 = arith.constant 0 : index
    %c0_40 = arith.constant 0 : index
    %56 = vector.load %arg5[%c3_38, %c0_39, %c0_40] : memref<5x120x160xf32, #tpu.memory_space<vmem>>, vector<1x120x160xf32>
    %57 = vector.shape_cast %56 : vector<1x120x160xf32> to vector<120x160xf32>
    %cst_41 = arith.constant dense<0.000000e+00> : vector<8x160xf32>
    %58 = tpu.matmul %55, %57, %cst_41 {dimension_numbers = #tpu.dot_dimension_numbers<[1], [0], [0], [1], [0, 0, 1, 1], [], []>} : vector<8x120xf32>, vector<120x160xf32>, vector<8x160xf32> -> vector<8x160xf32>
    %59 = arith.addf %54, %58 : vector<8x160xf32>
    %60 = vector.extract_strided_slice %40 {offsets = [4, 0], sizes = [8, 120], strides = [1, 1]} : vector<12x120xf32> to vector<8x120xf32>
    %c4_42 = arith.constant 4 : index
    %c0_43 = arith.constant 0 : index
    %c0_44 = arith.constant 0 : index
    %61 = vector.load %arg5[%c4_42, %c0_43, %c0_44] : memref<5x120x160xf32, #tpu.memory_space<vmem>>, vector<1x120x160xf32>
    %62 = vector.shape_cast %61 : vector<1x120x160xf32> to vector<120x160xf32>
    %cst_45 = arith.constant dense<0.000000e+00> : vector<8x160xf32>
    %63 = tpu.matmul %60, %62, %cst_45 {dimension_numbers = #tpu.dot_dimension_numbers<[1], [0], [0], [1], [0, 0, 1, 1], [], []>} : vector<8x120xf32>, vector<120x160xf32>, vector<8x160xf32> -> vector<8x160xf32>
    %64 = arith.addf %59, %63 : vector<8x160xf32>
    %c0_46 = arith.constant 0 : index
    %c0_47 = arith.constant 0 : index
    %65 = vector.load %arg6[%c0_46, %c0_47] : memref<1x160xf32, #tpu.memory_space<vmem>>, vector<1x160xf32>
    %66 = vector.broadcast %65 : vector<1x160xf32> to vector<8x160xf32>
    %67 = arith.addf %64, %66 : vector<8x160xf32>
    %cst_48 = arith.constant 0.000000e+00 : f32
    %68 = vector.broadcast %cst_48 : f32 to vector<8x160xf32>
    %69 = arith.maximumf %67, %68 : vector<8x160xf32>
    %70 = vector.extract_strided_slice %69 {offsets = [0, 0], sizes = [7, 160], strides = [1, 1]} : vector<8x160xf32> to vector<7x160xf32>
    %71 = vector.extract_strided_slice %69 {offsets = [1, 0], sizes = [7, 160], strides = [1, 1]} : vector<8x160xf32> to vector<7x160xf32>
    %72 = arith.maximumf %70, %71 : vector<7x160xf32>
    %73 = vector.extract_strided_slice %72 {offsets = [0, 0], sizes = [7, 140], strides = [1, 1]} : vector<7x160xf32> to vector<7x140xf32>
    %74 = vector.extract_strided_slice %72 {offsets = [0, 20], sizes = [7, 140], strides = [1, 1]} : vector<7x160xf32> to vector<7x140xf32>
    %75 = arith.maximumf %73, %74 : vector<7x140xf32>
    %c0_49 = arith.constant 0 : index
    %c0_50 = arith.constant 0 : index
    %76 = vector.load %arg8[%c0_49, %c0_50] : memref<1x10xf32, #tpu.memory_space<vmem>>, vector<1x10xf32>
    %77 = vector.extract_strided_slice %75 {offsets = [0, 0], sizes = [1, 140], strides = [1, 1]} : vector<7x140xf32> to vector<1x140xf32>
    %c0_51 = arith.constant 0 : index
    %c0_52 = arith.constant 0 : index
    %c0_53 = arith.constant 0 : index
    %78 = vector.load %arg7[%c0_51, %c0_52, %c0_53] : memref<4x140x10xf32, #tpu.memory_space<vmem>>, vector<1x140x10xf32>
    %79 = vector.shape_cast %78 : vector<1x140x10xf32> to vector<140x10xf32>
    %cst_54 = arith.constant dense<0.000000e+00> : vector<1x10xf32>
    %80 = tpu.matmul %77, %79, %cst_54 {dimension_numbers = #tpu.dot_dimension_numbers<[1], [0], [0], [1], [0, 0, 1, 1], [], []>} : vector<1x140xf32>, vector<140x10xf32>, vector<1x10xf32> -> vector<1x10xf32>
    %81 = arith.addf %76, %80 : vector<1x10xf32>
    %82 = vector.extract_strided_slice %75 {offsets = [2, 0], sizes = [1, 140], strides = [1, 1]} : vector<7x140xf32> to vector<1x140xf32>
    %c1_55 = arith.constant 1 : index
    %c0_56 = arith.constant 0 : index
    %c0_57 = arith.constant 0 : index
    %83 = vector.load %arg7[%c1_55, %c0_56, %c0_57] : memref<4x140x10xf32, #tpu.memory_space<vmem>>, vector<1x140x10xf32>
    %84 = vector.shape_cast %83 : vector<1x140x10xf32> to vector<140x10xf32>
    %cst_58 = arith.constant dense<0.000000e+00> : vector<1x10xf32>
    %85 = tpu.matmul %82, %84, %cst_58 {dimension_numbers = #tpu.dot_dimension_numbers<[1], [0], [0], [1], [0, 0, 1, 1], [], []>} : vector<1x140xf32>, vector<140x10xf32>, vector<1x10xf32> -> vector<1x10xf32>
    %86 = arith.addf %81, %85 : vector<1x10xf32>
    %87 = vector.extract_strided_slice %75 {offsets = [4, 0], sizes = [1, 140], strides = [1, 1]} : vector<7x140xf32> to vector<1x140xf32>
    %c2_59 = arith.constant 2 : index
    %c0_60 = arith.constant 0 : index
    %c0_61 = arith.constant 0 : index
    %88 = vector.load %arg7[%c2_59, %c0_60, %c0_61] : memref<4x140x10xf32, #tpu.memory_space<vmem>>, vector<1x140x10xf32>
    %89 = vector.shape_cast %88 : vector<1x140x10xf32> to vector<140x10xf32>
    %cst_62 = arith.constant dense<0.000000e+00> : vector<1x10xf32>
    %90 = tpu.matmul %87, %89, %cst_62 {dimension_numbers = #tpu.dot_dimension_numbers<[1], [0], [0], [1], [0, 0, 1, 1], [], []>} : vector<1x140xf32>, vector<140x10xf32>, vector<1x10xf32> -> vector<1x10xf32>
    %91 = arith.addf %86, %90 : vector<1x10xf32>
    %92 = vector.extract_strided_slice %75 {offsets = [6, 0], sizes = [1, 140], strides = [1, 1]} : vector<7x140xf32> to vector<1x140xf32>
    %c3_63 = arith.constant 3 : index
    %c0_64 = arith.constant 0 : index
    %c0_65 = arith.constant 0 : index
    %93 = vector.load %arg7[%c3_63, %c0_64, %c0_65] : memref<4x140x10xf32, #tpu.memory_space<vmem>>, vector<1x140x10xf32>
    %94 = vector.shape_cast %93 : vector<1x140x10xf32> to vector<140x10xf32>
    %cst_66 = arith.constant dense<0.000000e+00> : vector<1x10xf32>
    %95 = tpu.matmul %92, %94, %cst_66 {dimension_numbers = #tpu.dot_dimension_numbers<[1], [0], [0], [1], [0, 0, 1, 1], [], []>} : vector<1x140xf32>, vector<140x10xf32>, vector<1x10xf32> -> vector<1x10xf32>
    %96 = arith.addf %91, %95 : vector<1x10xf32>
    %c1_67 = arith.constant 1 : index
    %c0_68 = arith.constant 0 : index
    %c0_69 = arith.constant 0 : index
    %97 = vector.load %arg0[%c1_67, %c0_68, %c0_69] : memref<2x28x28xf32, #tpu.memory_space<vmem>>, vector<1x28x28xf32>
    %98 = vector.shape_cast %97 : vector<1x28x28xf32> to vector<28x28xf32>
    %99 = vector.extract_strided_slice %98 {offsets = [0, 0], sizes = [24, 28], strides = [1, 1]} : vector<28x28xf32> to vector<24x28xf32>
    %c0_70 = arith.constant 0 : index
    %c0_71 = arith.constant 0 : index
    %c0_72 = arith.constant 0 : index
    %100 = vector.load %arg1[%c0_70, %c0_71, %c0_72] : memref<5x28x240xf32, #tpu.memory_space<vmem>>, vector<1x28x240xf32>
    %101 = vector.shape_cast %100 : vector<1x28x240xf32> to vector<28x240xf32>
    %cst_73 = arith.constant dense<0.000000e+00> : vector<24x240xf32>
    %102 = tpu.matmul %99, %101, %cst_73 {dimension_numbers = #tpu.dot_dimension_numbers<[1], [0], [0], [1], [0, 0, 1, 1], [], []>} : vector<24x28xf32>, vector<28x240xf32>, vector<24x240xf32> -> vector<24x240xf32>
    %103 = vector.extract_strided_slice %98 {offsets = [1, 0], sizes = [24, 28], strides = [1, 1]} : vector<28x28xf32> to vector<24x28xf32>
    %c1_74 = arith.constant 1 : index
    %c0_75 = arith.constant 0 : index
    %c0_76 = arith.constant 0 : index
    %104 = vector.load %arg1[%c1_74, %c0_75, %c0_76] : memref<5x28x240xf32, #tpu.memory_space<vmem>>, vector<1x28x240xf32>
    %105 = vector.shape_cast %104 : vector<1x28x240xf32> to vector<28x240xf32>
    %cst_77 = arith.constant dense<0.000000e+00> : vector<24x240xf32>
    %106 = tpu.matmul %103, %105, %cst_77 {dimension_numbers = #tpu.dot_dimension_numbers<[1], [0], [0], [1], [0, 0, 1, 1], [], []>} : vector<24x28xf32>, vector<28x240xf32>, vector<24x240xf32> -> vector<24x240xf32>
    %107 = arith.addf %102, %106 : vector<24x240xf32>
    %108 = vector.extract_strided_slice %98 {offsets = [2, 0], sizes = [24, 28], strides = [1, 1]} : vector<28x28xf32> to vector<24x28xf32>
    %c2_78 = arith.constant 2 : index
    %c0_79 = arith.constant 0 : index
    %c0_80 = arith.constant 0 : index
    %109 = vector.load %arg1[%c2_78, %c0_79, %c0_80] : memref<5x28x240xf32, #tpu.memory_space<vmem>>, vector<1x28x240xf32>
    %110 = vector.shape_cast %109 : vector<1x28x240xf32> to vector<28x240xf32>
    %cst_81 = arith.constant dense<0.000000e+00> : vector<24x240xf32>
    %111 = tpu.matmul %108, %110, %cst_81 {dimension_numbers = #tpu.dot_dimension_numbers<[1], [0], [0], [1], [0, 0, 1, 1], [], []>} : vector<24x28xf32>, vector<28x240xf32>, vector<24x240xf32> -> vector<24x240xf32>
    %112 = arith.addf %107, %111 : vector<24x240xf32>
    %113 = vector.extract_strided_slice %98 {offsets = [3, 0], sizes = [24, 28], strides = [1, 1]} : vector<28x28xf32> to vector<24x28xf32>
    %c3_82 = arith.constant 3 : index
    %c0_83 = arith.constant 0 : index
    %c0_84 = arith.constant 0 : index
    %114 = vector.load %arg1[%c3_82, %c0_83, %c0_84] : memref<5x28x240xf32, #tpu.memory_space<vmem>>, vector<1x28x240xf32>
    %115 = vector.shape_cast %114 : vector<1x28x240xf32> to vector<28x240xf32>
    %cst_85 = arith.constant dense<0.000000e+00> : vector<24x240xf32>
    %116 = tpu.matmul %113, %115, %cst_85 {dimension_numbers = #tpu.dot_dimension_numbers<[1], [0], [0], [1], [0, 0, 1, 1], [], []>} : vector<24x28xf32>, vector<28x240xf32>, vector<24x240xf32> -> vector<24x240xf32>
    %117 = arith.addf %112, %116 : vector<24x240xf32>
    %118 = vector.extract_strided_slice %98 {offsets = [4, 0], sizes = [24, 28], strides = [1, 1]} : vector<28x28xf32> to vector<24x28xf32>
    %c4_86 = arith.constant 4 : index
    %c0_87 = arith.constant 0 : index
    %c0_88 = arith.constant 0 : index
    %119 = vector.load %arg1[%c4_86, %c0_87, %c0_88] : memref<5x28x240xf32, #tpu.memory_space<vmem>>, vector<1x28x240xf32>
    %120 = vector.shape_cast %119 : vector<1x28x240xf32> to vector<28x240xf32>
    %cst_89 = arith.constant dense<0.000000e+00> : vector<24x240xf32>
    %121 = tpu.matmul %118, %120, %cst_89 {dimension_numbers = #tpu.dot_dimension_numbers<[1], [0], [0], [1], [0, 0, 1, 1], [], []>} : vector<24x28xf32>, vector<28x240xf32>, vector<24x240xf32> -> vector<24x240xf32>
    %122 = arith.addf %117, %121 : vector<24x240xf32>
    %c0_90 = arith.constant 0 : index
    %c0_91 = arith.constant 0 : index
    %123 = vector.load %arg2[%c0_90, %c0_91] : memref<1x240xf32, #tpu.memory_space<vmem>>, vector<1x240xf32>
    %124 = vector.broadcast %123 : vector<1x240xf32> to vector<24x240xf32>
    %125 = arith.addf %122, %124 : vector<24x240xf32>
    %cst_92 = arith.constant 0.000000e+00 : f32
    %126 = vector.broadcast %cst_92 : f32 to vector<24x240xf32>
    %127 = arith.maximumf %125, %126 : vector<24x240xf32>
    %128 = vector.extract_strided_slice %127 {offsets = [0, 0], sizes = [23, 240], strides = [1, 1]} : vector<24x240xf32> to vector<23x240xf32>
    %129 = vector.extract_strided_slice %127 {offsets = [1, 0], sizes = [23, 240], strides = [1, 1]} : vector<24x240xf32> to vector<23x240xf32>
    %130 = arith.maximumf %128, %129 : vector<23x240xf32>
    %c0_93 = arith.constant 0 : index
    %c0_94 = arith.constant 0 : index
    %131 = vector.load %arg3[%c0_93, %c0_94] : memref<12x23xf32, #tpu.memory_space<vmem>>, vector<12x23xf32>
    %cst_95 = arith.constant dense<0.000000e+00> : vector<12x240xf32>
    %132 = tpu.matmul %131, %130, %cst_95 {dimension_numbers = #tpu.dot_dimension_numbers<[1], [0], [0], [1], [0, 0, 1, 1], [], []>} : vector<12x23xf32>, vector<23x240xf32>, vector<12x240xf32> -> vector<12x240xf32>
    %133 = vector.extract_strided_slice %132 {offsets = [0, 0], sizes = [12, 230], strides = [1, 1]} : vector<12x240xf32> to vector<12x230xf32>
    %134 = vector.extract_strided_slice %132 {offsets = [0, 10], sizes = [12, 230], strides = [1, 1]} : vector<12x240xf32> to vector<12x230xf32>
    %135 = arith.maximumf %133, %134 : vector<12x230xf32>
    %c0_96 = arith.constant 0 : index
    %c0_97 = arith.constant 0 : index
    %136 = vector.load %arg4[%c0_96, %c0_97] : memref<230x120xf32, #tpu.memory_space<vmem>>, vector<230x120xf32>
    %cst_98 = arith.constant dense<0.000000e+00> : vector<12x120xf32>
    %137 = tpu.matmul %135, %136, %cst_98 {dimension_numbers = #tpu.dot_dimension_numbers<[1], [0], [0], [1], [0, 0, 1, 1], [], []>} : vector<12x230xf32>, vector<230x120xf32>, vector<12x120xf32> -> vector<12x120xf32>
    %138 = vector.extract_strided_slice %137 {offsets = [0, 0], sizes = [8, 120], strides = [1, 1]} : vector<12x120xf32> to vector<8x120xf32>
    %c0_99 = arith.constant 0 : index
    %c0_100 = arith.constant 0 : index
    %c0_101 = arith.constant 0 : index
    %139 = vector.load %arg5[%c0_99, %c0_100, %c0_101] : memref<5x120x160xf32, #tpu.memory_space<vmem>>, vector<1x120x160xf32>
    %140 = vector.shape_cast %139 : vector<1x120x160xf32> to vector<120x160xf32>
    %cst_102 = arith.constant dense<0.000000e+00> : vector<8x160xf32>
    %141 = tpu.matmul %138, %140, %cst_102 {dimension_numbers = #tpu.dot_dimension_numbers<[1], [0], [0], [1], [0, 0, 1, 1], [], []>} : vector<8x120xf32>, vector<120x160xf32>, vector<8x160xf32> -> vector<8x160xf32>
    %142 = vector.extract_strided_slice %137 {offsets = [1, 0], sizes = [8, 120], strides = [1, 1]} : vector<12x120xf32> to vector<8x120xf32>
    %c1_103 = arith.constant 1 : index
    %c0_104 = arith.constant 0 : index
    %c0_105 = arith.constant 0 : index
    %143 = vector.load %arg5[%c1_103, %c0_104, %c0_105] : memref<5x120x160xf32, #tpu.memory_space<vmem>>, vector<1x120x160xf32>
    %144 = vector.shape_cast %143 : vector<1x120x160xf32> to vector<120x160xf32>
    %cst_106 = arith.constant dense<0.000000e+00> : vector<8x160xf32>
    %145 = tpu.matmul %142, %144, %cst_106 {dimension_numbers = #tpu.dot_dimension_numbers<[1], [0], [0], [1], [0, 0, 1, 1], [], []>} : vector<8x120xf32>, vector<120x160xf32>, vector<8x160xf32> -> vector<8x160xf32>
    %146 = arith.addf %141, %145 : vector<8x160xf32>
    %147 = vector.extract_strided_slice %137 {offsets = [2, 0], sizes = [8, 120], strides = [1, 1]} : vector<12x120xf32> to vector<8x120xf32>
    %c2_107 = arith.constant 2 : index
    %c0_108 = arith.constant 0 : index
    %c0_109 = arith.constant 0 : index
    %148 = vector.load %arg5[%c2_107, %c0_108, %c0_109] : memref<5x120x160xf32, #tpu.memory_space<vmem>>, vector<1x120x160xf32>
    %149 = vector.shape_cast %148 : vector<1x120x160xf32> to vector<120x160xf32>
    %cst_110 = arith.constant dense<0.000000e+00> : vector<8x160xf32>
    %150 = tpu.matmul %147, %149, %cst_110 {dimension_numbers = #tpu.dot_dimension_numbers<[1], [0], [0], [1], [0, 0, 1, 1], [], []>} : vector<8x120xf32>, vector<120x160xf32>, vector<8x160xf32> -> vector<8x160xf32>
    %151 = arith.addf %146, %150 : vector<8x160xf32>
    %152 = vector.extract_strided_slice %137 {offsets = [3, 0], sizes = [8, 120], strides = [1, 1]} : vector<12x120xf32> to vector<8x120xf32>
    %c3_111 = arith.constant 3 : index
    %c0_112 = arith.constant 0 : index
    %c0_113 = arith.constant 0 : index
    %153 = vector.load %arg5[%c3_111, %c0_112, %c0_113] : memref<5x120x160xf32, #tpu.memory_space<vmem>>, vector<1x120x160xf32>
    %154 = vector.shape_cast %153 : vector<1x120x160xf32> to vector<120x160xf32>
    %cst_114 = arith.constant dense<0.000000e+00> : vector<8x160xf32>
    %155 = tpu.matmul %152, %154, %cst_114 {dimension_numbers = #tpu.dot_dimension_numbers<[1], [0], [0], [1], [0, 0, 1, 1], [], []>} : vector<8x120xf32>, vector<120x160xf32>, vector<8x160xf32> -> vector<8x160xf32>
    %156 = arith.addf %151, %155 : vector<8x160xf32>
    %157 = vector.extract_strided_slice %137 {offsets = [4, 0], sizes = [8, 120], strides = [1, 1]} : vector<12x120xf32> to vector<8x120xf32>
    %c4_115 = arith.constant 4 : index
    %c0_116 = arith.constant 0 : index
    %c0_117 = arith.constant 0 : index
    %158 = vector.load %arg5[%c4_115, %c0_116, %c0_117] : memref<5x120x160xf32, #tpu.memory_space<vmem>>, vector<1x120x160xf32>
    %159 = vector.shape_cast %158 : vector<1x120x160xf32> to vector<120x160xf32>
    %cst_118 = arith.constant dense<0.000000e+00> : vector<8x160xf32>
    %160 = tpu.matmul %157, %159, %cst_118 {dimension_numbers = #tpu.dot_dimension_numbers<[1], [0], [0], [1], [0, 0, 1, 1], [], []>} : vector<8x120xf32>, vector<120x160xf32>, vector<8x160xf32> -> vector<8x160xf32>
    %161 = arith.addf %156, %160 : vector<8x160xf32>
    %c0_119 = arith.constant 0 : index
    %c0_120 = arith.constant 0 : index
    %162 = vector.load %arg6[%c0_119, %c0_120] : memref<1x160xf32, #tpu.memory_space<vmem>>, vector<1x160xf32>
    %163 = vector.broadcast %162 : vector<1x160xf32> to vector<8x160xf32>
    %164 = arith.addf %161, %163 : vector<8x160xf32>
    %cst_121 = arith.constant 0.000000e+00 : f32
    %165 = vector.broadcast %cst_121 : f32 to vector<8x160xf32>
    %166 = arith.maximumf %164, %165 : vector<8x160xf32>
    %167 = vector.extract_strided_slice %166 {offsets = [0, 0], sizes = [7, 160], strides = [1, 1]} : vector<8x160xf32> to vector<7x160xf32>
    %168 = vector.extract_strided_slice %166 {offsets = [1, 0], sizes = [7, 160], strides = [1, 1]} : vector<8x160xf32> to vector<7x160xf32>
    %169 = arith.maximumf %167, %168 : vector<7x160xf32>
    %170 = vector.extract_strided_slice %169 {offsets = [0, 0], sizes = [7, 140], strides = [1, 1]} : vector<7x160xf32> to vector<7x140xf32>
    %171 = vector.extract_strided_slice %169 {offsets = [0, 20], sizes = [7, 140], strides = [1, 1]} : vector<7x160xf32> to vector<7x140xf32>
    %172 = arith.maximumf %170, %171 : vector<7x140xf32>
    %c0_122 = arith.constant 0 : index
    %c0_123 = arith.constant 0 : index
    %173 = vector.load %arg8[%c0_122, %c0_123] : memref<1x10xf32, #tpu.memory_space<vmem>>, vector<1x10xf32>
    %174 = vector.extract_strided_slice %172 {offsets = [0, 0], sizes = [1, 140], strides = [1, 1]} : vector<7x140xf32> to vector<1x140xf32>
    %c0_124 = arith.constant 0 : index
    %c0_125 = arith.constant 0 : index
    %c0_126 = arith.constant 0 : index
    %175 = vector.load %arg7[%c0_124, %c0_125, %c0_126] : memref<4x140x10xf32, #tpu.memory_space<vmem>>, vector<1x140x10xf32>
    %176 = vector.shape_cast %175 : vector<1x140x10xf32> to vector<140x10xf32>
    %cst_127 = arith.constant dense<0.000000e+00> : vector<1x10xf32>
    %177 = tpu.matmul %174, %176, %cst_127 {dimension_numbers = #tpu.dot_dimension_numbers<[1], [0], [0], [1], [0, 0, 1, 1], [], []>} : vector<1x140xf32>, vector<140x10xf32>, vector<1x10xf32> -> vector<1x10xf32>
    %178 = arith.addf %173, %177 : vector<1x10xf32>
    %179 = vector.extract_strided_slice %172 {offsets = [2, 0], sizes = [1, 140], strides = [1, 1]} : vector<7x140xf32> to vector<1x140xf32>
    %c1_128 = arith.constant 1 : index
    %c0_129 = arith.constant 0 : index
    %c0_130 = arith.constant 0 : index
    %180 = vector.load %arg7[%c1_128, %c0_129, %c0_130] : memref<4x140x10xf32, #tpu.memory_space<vmem>>, vector<1x140x10xf32>
    %181 = vector.shape_cast %180 : vector<1x140x10xf32> to vector<140x10xf32>
    %cst_131 = arith.constant dense<0.000000e+00> : vector<1x10xf32>
    %182 = tpu.matmul %179, %181, %cst_131 {dimension_numbers = #tpu.dot_dimension_numbers<[1], [0], [0], [1], [0, 0, 1, 1], [], []>} : vector<1x140xf32>, vector<140x10xf32>, vector<1x10xf32> -> vector<1x10xf32>
    %183 = arith.addf %178, %182 : vector<1x10xf32>
    %184 = vector.extract_strided_slice %172 {offsets = [4, 0], sizes = [1, 140], strides = [1, 1]} : vector<7x140xf32> to vector<1x140xf32>
    %c2_132 = arith.constant 2 : index
    %c0_133 = arith.constant 0 : index
    %c0_134 = arith.constant 0 : index
    %185 = vector.load %arg7[%c2_132, %c0_133, %c0_134] : memref<4x140x10xf32, #tpu.memory_space<vmem>>, vector<1x140x10xf32>
    %186 = vector.shape_cast %185 : vector<1x140x10xf32> to vector<140x10xf32>
    %cst_135 = arith.constant dense<0.000000e+00> : vector<1x10xf32>
    %187 = tpu.matmul %184, %186, %cst_135 {dimension_numbers = #tpu.dot_dimension_numbers<[1], [0], [0], [1], [0, 0, 1, 1], [], []>} : vector<1x140xf32>, vector<140x10xf32>, vector<1x10xf32> -> vector<1x10xf32>
    %188 = arith.addf %183, %187 : vector<1x10xf32>
    %189 = vector.extract_strided_slice %172 {offsets = [6, 0], sizes = [1, 140], strides = [1, 1]} : vector<7x140xf32> to vector<1x140xf32>
    %c3_136 = arith.constant 3 : index
    %c0_137 = arith.constant 0 : index
    %c0_138 = arith.constant 0 : index
    %190 = vector.load %arg7[%c3_136, %c0_137, %c0_138] : memref<4x140x10xf32, #tpu.memory_space<vmem>>, vector<1x140x10xf32>
    %191 = vector.shape_cast %190 : vector<1x140x10xf32> to vector<140x10xf32>
    %cst_139 = arith.constant dense<0.000000e+00> : vector<1x10xf32>
    %192 = tpu.matmul %189, %191, %cst_139 {dimension_numbers = #tpu.dot_dimension_numbers<[1], [0], [0], [1], [0, 0, 1, 1], [], []>} : vector<1x140xf32>, vector<140x10xf32>, vector<1x10xf32> -> vector<1x10xf32>
    %193 = arith.addf %188, %192 : vector<1x10xf32>
    %194 = tpu.concatenate %96, %193 in 0 : vector<1x10xf32>, vector<1x10xf32> -> vector<2x10xf32>
    %c0_140 = arith.constant 0 : index
    %c0_141 = arith.constant 0 : index
    %195 = vector.load %arg9[%c0_140, %c0_141] : memref<2x10xf32, #tpu.memory_space<vmem>>, vector<2x10xf32>
    tpu.vector_store %arg9[%c0_140, %c0_141], %194 {strides = array<i32>} : memref<2x10xf32, #tpu.memory_space<vmem>>, vector<2x10xf32>,
    return
  }
}

</mosaic_0001>

<llo_original>
// kernel: conv_mnist_forward.1
$region0: #{conv_mnist_forward.1}
  #allocation0 [shape = 'u32[]', space=smem, size = 0x4, offset = 0x4, fixed_abs, tag = 'smem constant byte address 0x4 - core index']
  #allocation1 [shape = 'u32[72,128]{1,0:T(1,128)}', space=vmem, size = 0x9000, scoped, tag = 'internal scratch']
  %s0 = inlined_call_operand.vmem [shape: f32[2,28,28], index: 0, kind: input, shape index: {}]
  %s1 = inlined_call_operand.vmem [shape: f32[5,28,240], index: 1, kind: input, shape index: {}]
  %s2 = inlined_call_operand.vmem [shape: f32[1,240], index: 2, kind: input, shape index: {}]
  %s3 = inlined_call_operand.vmem [shape: f32[12,23], index: 3, kind: input, shape index: {}]
  %s4 = inlined_call_operand.vmem [shape: f32[230,120], index: 4, kind: input, shape index: {}]
  %s5 = inlined_call_operand.vmem [shape: f32[5,120,160], index: 5, kind: input, shape index: {}]
  %s6 = inlined_call_operand.vmem [shape: f32[1,160], index: 6, kind: input, shape index: {}]
  %s7 = inlined_call_operand.vmem [shape: f32[4,140,10], index: 7, kind: input, shape index: {}]
  %s8 = inlined_call_operand.vmem [shape: f32[1,10], index: 8, kind: input, shape index: {}]
  %s9 = inlined_call_operand.hbm [shape: f32[2,10], index: 9, kind: output, shape index: {}]
  %s10 = sld [smem:[#allocation0]]
  $region46: #{conv_mnist_forward.1} parent=0
    _
  %s12 = ssub.s32 1, %s10
  %s13 = scalar_select 0, %s12, %s10
  $region1: #{conv_mnist_forward.1} parent=0
    #allocation2 [shape = 'u8[1024]{0}', space=vmem, size = 0x400, scoped, tag = 'output window, operand 0, single buffered']
    #allocation3 [shape = 's32[1]{0}', space=sflag, size = 0x4, scoped, tag = 'scoped memory for conv_mnist_forward.1']
    %14 = vsyncpa [#allocation3], 0
    // Predicated region
    $region2: #{conv_mnist_forward.1} parent=1 // pred_check
      _
    $region3: #{conv_mnist_forward.1} parent=1 // pred_check_branch
      %16 = sbr.rel (0) target = $region5
    $region4: #{conv_mnist_forward.1} parent=1 // pred_region
      _
    $region5: #{conv_mnist_forward.1} parent=1 // pred_fallthru
      _
    // Predicated region
    $region6: #{conv_mnist_forward.1} parent=1 // pred_check
      _
    $region7: #{conv_mnist_forward.1} parent=1 // pred_check_branch
      %18 = sbr.rel (0) target = $region9
    $region8: #{conv_mnist_forward.1} parent=1 // pred_region
      _
    $region9: #{conv_mnist_forward.1} parent=1 // pred_fallthru
      _
    // Predicated region
    $region10: #{conv_mnist_forward.1} parent=1 // pred_check
      _
    $region11: #{conv_mnist_forward.1} parent=1 // pred_check_branch
      %20 = sbr.rel (0) target = $region13
    $region12: #{conv_mnist_forward.1} parent=1 // pred_region
      _
    $region13: #{conv_mnist_forward.1} parent=1 // pred_fallthru
      _
    // Predicated region
    $region14: #{conv_mnist_forward.1} parent=1 // pred_check
      _
    $region15: #{conv_mnist_forward.1} parent=1 // pred_check_branch
      %22 = sbr.rel (0) target = $region17
    $region16: #{conv_mnist_forward.1} parent=1 // pred_region
      _
    $region17: #{conv_mnist_forward.1} parent=1 // pred_fallthru
      _
    // Predicated region
    $region18: #{conv_mnist_forward.1} parent=1 // pred_check
      _
    $region19: #{conv_mnist_forward.1} parent=1 // pred_check_branch
      %24 = sbr.rel (0) target = $region21
    $region20: #{conv_mnist_forward.1} parent=1 // pred_region
      _
    $region21: #{conv_mnist_forward.1} parent=1 // pred_fallthru
      _
    // Predicated region
    $region22: #{conv_mnist_forward.1} parent=1 // pred_check
      _
    $region23: #{conv_mnist_forward.1} parent=1 // pred_check_branch
      %26 = sbr.rel (0) target = $region25
    $region24: #{conv_mnist_forward.1} parent=1 // pred_region
      _
    $region25: #{conv_mnist_forward.1} parent=1 // pred_fallthru
      _
    // Predicated region
    $region26: #{conv_mnist_forward.1} parent=1 // pred_check
      _
    $region27: #{conv_mnist_forward.1} parent=1 // pred_check_branch
      %28 = sbr.rel (0) target = $region29
    $region28: #{conv_mnist_forward.1} parent=1 // pred_region
      _
    $region29: #{conv_mnist_forward.1} parent=1 // pred_fallthru
      _
    // Predicated region
    $region30: #{conv_mnist_forward.1} parent=1 // pred_check
      _
    $region31: #{conv_mnist_forward.1} parent=1 // pred_check_branch
      %30 = sbr.rel (0) target = $region33
    $region32: #{conv_mnist_forward.1} parent=1 // pred_region
      _
    $region33: #{conv_mnist_forward.1} parent=1 // pred_fallthru
      _
    // Predicated region
    $region34: #{conv_mnist_forward.1} parent=1 // pred_check
      _
    $region35: #{conv_mnist_forward.1} parent=1 // pred_check_branch
      %32 = sbr.rel (0) target = $region37
    $region36: #{conv_mnist_forward.1} parent=1 // pred_region
      _
    $region37: #{conv_mnist_forward.1} parent=1 // pred_fallthru
      _
    %v33 = vld [vmem:[%s0] sm:$0xff]
    %v34 = vld [vmem:[%s0 + $0x8] sm:$0xff]
    %v35 = vld [vmem:[%s0 + $0x10] sm:$0xff]
    %v36 = vld [vmem:[%s0 + $0x18] sm:$0xf]
    %v37 = vld [vmem:[%s1] sm:$0xff]
    %v38 = vld [vmem:[%s1 + $0x8] sm:$0xff]
    %v39 = vld [vmem:[%s1 + $0x10] sm:$0xff]
    %v40 = vld [vmem:[%s1 + $0x18] sm:$0xff]
    %v41 = vld [vmem:[%s1 + $0x20] sm:$0xff]
    %v42 = vld [vmem:[%s1 + $0x28] sm:$0xff]
    %v43 = vld [vmem:[%s1 + $0x30] sm:$0xf]
    %v44 = vld [vmem:[%s1 + $0x38] sm:$0xf]
    %s45 = scalar_lea.vmem %s1, 64
    %v46 = vld [vmem:[%s45] sm:$0xff]
    %v47 = vld [vmem:[%s45 + $0x8] sm:$0xff]
    %v48 = vld [vmem:[%s45 + $0x10] sm:$0xff]
    %v49 = vld [vmem:[%s45 + $0x18] sm:$0xff]
    %v50 = vld [vmem:[%s45 + $0x20] sm:$0xff]
    %v51 = vld [vmem:[%s45 + $0x28] sm:$0xff]
    %v52 = vld [vmem:[%s45 + $0x30] sm:$0xf]
    %v53 = vld [vmem:[%s45 + $0x38] sm:$0xf]
    %vm58 = vcmask 1046528
    %v59 = vrot.slane %v33, 1
    %v60 = vrot.slane %v34, 1
    %v61 = vsel %vm58, %v59, %v60
    %v62 = vrot.slane %v35, 1
    %v63 = vsel %vm58, %v60, %v62
    %v64 = vrot.slane %v36, 1
    %v65 = vsel %vm58, %v62, %v64
    %vm66 = vcmask 228352
    %v67 = vsel %vm66, %v61, 0
    %v69 = vsel %vm66, %v63, 0
    %v71 = vsel %vm66, %v65, 0
    %vm73 = vcmask 1043456
    %v75 = vsel %vm73, %v52, 0
    %v78 = vsel %vm73, %v53, 0
    %80 = vmatpush.msra.mxu0 0.0
    %81 = vmatpush.msra.mxu0 0.0
    %82 = vmatpush.msra.mxu0 0.0
    %83 = vmatpush.msra.mxu0 0.0
    %84 = vmatpush.msra.mxu0 0.0
    %85 = vmatpush.msra.mxu0 0.0
    %86 = vmatpush.msra.mxu0 0.0
    %87 = vmatpush.msra.mxu0 0.0
    %88 = vmatpush.msra.mxu0 0.0
    %89 = vmatpush.msra.mxu0 0.0
    %90 = vmatpush.msra.mxu0 0.0
    %91 = vmatpush.msra.mxu0 0.0
    %92 = vmatpush.msra.mxu0 %v75
    %93 = vmatpush.msra.mxu0 %v50
    %94 = vmatpush.msra.mxu0 %v48
    %95 = vmatpush.msra.mxu0 %v46
    %96 = vmatmul.f32.gmra.mxu0 %v67
    %v97 = vpop.f32.mrf.mxu0
    %v98 = vadd.f32 0.0, %v97
    %99 = vmatmul.f32.gmra.mxu0 %v69
    %v100 = vpop.f32.mrf.mxu0
    %v101 = vadd.f32 0.0, %v100
    %102 = vmatmul.f32.gmra.mxu0 %v71
    %v103 = vpop.f32.mrf.mxu0
    %v104 = vadd.f32 0.0, %v103
    %105 = vdwg.mxu0
    %106 = vmatpush.msra.mxu0 0.0
    %107 = vmatpush.msra.mxu0 0.0
    %108 = vmatpush.msra.mxu0 0.0
    %109 = vmatpush.msra.mxu0 0.0
    %110 = vmatpush.msra.mxu0 0.0
    %111 = vmatpush.msra.mxu0 0.0
    %112 = vmatpush.msra.mxu0 0.0
    %113 = vmatpush.msra.mxu0 0.0
    %114 = vmatpush.msra.mxu0 0.0
    %115 = vmatpush.msra.mxu0 0.0
    %116 = vmatpush.msra.mxu0 0.0
    %117 = vmatpush.msra.mxu0 0.0
    %118 = vmatpush.msra.mxu0 %v78
    %119 = vmatpush.msra.mxu0 %v51
    %120 = vmatpush.msra.mxu0 %v49
    %121 = vmatpush.msra.mxu0 %v47
    %122 = vmatmul.f32.gmra.mxu0 %v67
    %v123 = vpop.f32.mrf.mxu0
    %v124 = vadd.f32 0.0, %v123
    %125 = vmatmul.f32.gmra.mxu0 %v69
    %v126 = vpop.f32.mrf.mxu0
    %v127 = vadd.f32 0.0, %v126
    %128 = vmatmul.f32.gmra.mxu0 %v71
    %v129 = vpop.f32.mrf.mxu0
    %v130 = vadd.f32 0.0, %v129
    %131 = vdwg.mxu0
    %v132 = vsel %vm66, %v33, 0
    %v134 = vsel %vm66, %v34, 0
    %v136 = vsel %vm66, %v35, 0
    %v139 = vsel %vm73, %v43, 0
    %v142 = vsel %vm73, %v44, 0
    %144 = vmatpush.msra.mxu0 0.0
    %145 = vmatpush.msra.mxu0 0.0
    %146 = vmatpush.msra.mxu0 0.0
    %147 = vmatpush.msra.mxu0 0.0
    %148 = vmatpush.msra.mxu0 0.0
    %149 = vmatpush.msra.mxu0 0.0
    %150 = vmatpush.msra.mxu0 0.0
    %151 = vmatpush.msra.mxu0 0.0
    %152 = vmatpush.msra.mxu0 0.0
    %153 = vmatpush.msra.mxu0 0.0
    %154 = vmatpush.msra.mxu0 0.0
    %155 = vmatpush.msra.mxu0 0.0
    %156 = vmatpush.msra.mxu0 %v139
    %157 = vmatpush.msra.mxu0 %v41
    %158 = vmatpush.msra.mxu0 %v39
    %159 = vmatpush.msra.mxu0 %v37
    %160 = vmatmul.f32.gmra.mxu0 %v132
    %v161 = vpop.f32.mrf.mxu0
    %v162 = vadd.f32 %v98, %v161
    %163 = vmatmul.f32.gmra.mxu0 %v134
    %v164 = vpop.f32.mrf.mxu0
    %v165 = vadd.f32 %v101, %v164
    %166 = vmatmul.f32.gmra.mxu0 %v136
    %v167 = vpop.f32.mrf.mxu0
    %v168 = vadd.f32 %v104, %v167
    %169 = vdwg.mxu0
    %170 = vmatpush.msra.mxu0 0.0
    %171 = vmatpush.msra.mxu0 0.0
    %172 = vmatpush.msra.mxu0 0.0
    %173 = vmatpush.msra.mxu0 0.0
    %174 = vmatpush.msra.mxu0 0.0
    %175 = vmatpush.msra.mxu0 0.0
    %176 = vmatpush.msra.mxu0 0.0
    %177 = vmatpush.msra.mxu0 0.0
    %178 = vmatpush.msra.mxu0 0.0
    %179 = vmatpush.msra.mxu0 0.0
    %180 = vmatpush.msra.mxu0 0.0
    %181 = vmatpush.msra.mxu0 0.0
    %182 = vmatpush.msra.mxu0 %v142
    %183 = vmatpush.msra.mxu0 %v42
    %184 = vmatpush.msra.mxu0 %v40
    %185 = vmatpush.msra.mxu0 %v38
    %186 = vmatmul.f32.gmra.mxu0 %v132
    %v187 = vpop.f32.mrf.mxu0
    %v188 = vadd.f32 %v124, %v187
    %189 = vmatmul.f32.gmra.mxu0 %v134
    %v190 = vpop.f32.mrf.mxu0
    %v191 = vadd.f32 %v127, %v190
    %192 = vmatmul.f32.gmra.mxu0 %v136
    %v193 = vpop.f32.mrf.mxu0
    %v194 = vadd.f32 %v130, %v193
    %195 = vdwg.mxu0
    %s196 = scalar_lea.vmem %s1, 128
    %v197 = vld [vmem:[%s196] sm:$0xff]
    %v198 = vld [vmem:[%s196 + $0x8] sm:$0xff]
    %v199 = vld [vmem:[%s196 + $0x10] sm:$0xff]
    %v200 = vld [vmem:[%s196 + $0x18] sm:$0xff]
    %v201 = vld [vmem:[%s196 + $0x20] sm:$0xff]
    %v202 = vld [vmem:[%s196 + $0x28] sm:$0xff]
    %v203 = vld [vmem:[%s196 + $0x30] sm:$0xf]
    %v204 = vld [vmem:[%s196 + $0x38] sm:$0xf]
    %vm205 = vcmask 1045504
    %v206 = vrot.slane %v33, 2
    %v207 = vrot.slane %v34, 2
    %v208 = vsel %vm205, %v206, %v207
    %v209 = vrot.slane %v35, 2
    %v210 = vsel %vm205, %v207, %v209
    %v211 = vrot.slane %v36, 2
    %v212 = vsel %vm205, %v209, %v211
    %v213 = vsel %vm66, %v208, 0
    %v215 = vsel %vm66, %v210, 0
    %v217 = vsel %vm66, %v212, 0
    %v220 = vsel %vm73, %v203, 0
    %v223 = vsel %vm73, %v204, 0
    %225 = vmatpush.msra.mxu0 0.0
    %226 = vmatpush.msra.mxu0 0.0
    %227 = vmatpush.msra.mxu0 0.0
    %228 = vmatpush.msra.mxu0 0.0
    %229 = vmatpush.msra.mxu0 0.0
    %230 = vmatpush.msra.mxu0 0.0
    %231 = vmatpush.msra.mxu0 0.0
    %232 = vmatpush.msra.mxu0 0.0
    %233 = vmatpush.msra.mxu0 0.0
    %234 = vmatpush.msra.mxu0 0.0
    %235 = vmatpush.msra.mxu0 0.0
    %236 = vmatpush.msra.mxu0 0.0
    %237 = vmatpush.msra.mxu0 %v220
    %238 = vmatpush.msra.mxu0 %v201
    %239 = vmatpush.msra.mxu0 %v199
    %240 = vmatpush.msra.mxu0 %v197
    %241 = vmatmul.f32.gmra.mxu0 %v213
    %v242 = vpop.f32.mrf.mxu0
    %v243 = vadd.f32 0.0, %v242
    %244 = vmatmul.f32.gmra.mxu0 %v215
    %v245 = vpop.f32.mrf.mxu0
    %v246 = vadd.f32 0.0, %v245
    %247 = vmatmul.f32.gmra.mxu0 %v217
    %v248 = vpop.f32.mrf.mxu0
    %v249 = vadd.f32 0.0, %v248
    %250 = vdwg.mxu0
    %251 = vmatpush.msra.mxu0 0.0
    %252 = vmatpush.msra.mxu0 0.0
    %253 = vmatpush.msra.mxu0 0.0
    %254 = vmatpush.msra.mxu0 0.0
    %255 = vmatpush.msra.mxu0 0.0
    %256 = vmatpush.msra.mxu0 0.0
    %257 = vmatpush.msra.mxu0 0.0
    %258 = vmatpush.msra.mxu0 0.0
    %259 = vmatpush.msra.mxu0 0.0
    %260 = vmatpush.msra.mxu0 0.0
    %261 = vmatpush.msra.mxu0 0.0
    %262 = vmatpush.msra.mxu0 0.0
    %263 = vmatpush.msra.mxu0 %v223
    %264 = vmatpush.msra.mxu0 %v202
    %265 = vmatpush.msra.mxu0 %v200
    %266 = vmatpush.msra.mxu0 %v198
    %267 = vmatmul.f32.gmra.mxu0 %v213
    %v268 = vpop.f32.mrf.mxu0
    %v269 = vadd.f32 0.0, %v268
    %270 = vmatmul.f32.gmra.mxu0 %v215
    %v271 = vpop.f32.mrf.mxu0
    %v272 = vadd.f32 0.0, %v271
    %273 = vmatmul.f32.gmra.mxu0 %v217
    %v274 = vpop.f32.mrf.mxu0
    %v275 = vadd.f32 0.0, %v274
    %276 = vdwg.mxu0
    %v277 = vadd.f32 %v162, %v243
    %v278 = vadd.f32 %v188, %v269
    %v279 = vadd.f32 %v165, %v246
    %v280 = vadd.f32 %v191, %v272
    %v281 = vadd.f32 %v168, %v249
    %v282 = vadd.f32 %v194, %v275
    %s283 = scalar_lea.vmem %s1, 192
    %v284 = vld [vmem:[%s283] sm:$0xff]
    %v285 = vld [vmem:[%s283 + $0x8] sm:$0xff]
    %v286 = vld [vmem:[%s283 + $0x10] sm:$0xff]
    %v287 = vld [vmem:[%s283 + $0x18] sm:$0xff]
    %v288 = vld [vmem:[%s283 + $0x20] sm:$0xff]
    %v289 = vld [vmem:[%s283 + $0x28] sm:$0xff]
    %v290 = vld [vmem:[%s283 + $0x30] sm:$0xf]
    %v291 = vld [vmem:[%s283 + $0x38] sm:$0xf]
    %vm292 = vcmask 1044480
    %v293 = vrot.slane %v33, 3
    %v294 = vrot.slane %v34, 3
    %v295 = vsel %vm292, %v293, %v294
    %v296 = vrot.slane %v35, 3
    %v297 = vsel %vm292, %v294, %v296
    %v298 = vrot.slane %v36, 3
    %v299 = vsel %vm292, %v296, %v298
    %v300 = vsel %vm66, %v295, 0
    %v302 = vsel %vm66, %v297, 0
    %v304 = vsel %vm66, %v299, 0
    %v307 = vsel %vm73, %v290, 0
    %v310 = vsel %vm73, %v291, 0
    %312 = vmatpush.msra.mxu0 0.0
    %313 = vmatpush.msra.mxu0 0.0
    %314 = vmatpush.msra.mxu0 0.0
    %315 = vmatpush.msra.mxu0 0.0
    %316 = vmatpush.msra.mxu0 0.0
    %317 = vmatpush.msra.mxu0 0.0
    %318 = vmatpush.msra.mxu0 0.0
    %319 = vmatpush.msra.mxu0 0.0
    %320 = vmatpush.msra.mxu0 0.0
    %321 = vmatpush.msra.mxu0 0.0
    %322 = vmatpush.msra.mxu0 0.0
    %323 = vmatpush.msra.mxu0 0.0
    %324 = vmatpush.msra.mxu0 %v307
    %325 = vmatpush.msra.mxu0 %v288
    %326 = vmatpush.msra.mxu0 %v286
    %327 = vmatpush.msra.mxu0 %v284
    %328 = vmatmul.f32.gmra.mxu0 %v300
    %v329 = vpop.f32.mrf.mxu0
    %v330 = vadd.f32 0.0, %v329
    %331 = vmatmul.f32.gmra.mxu0 %v302
    %v332 = vpop.f32.mrf.mxu0
    %v333 = vadd.f32 0.0, %v332
    %334 = vmatmul.f32.gmra.mxu0 %v304
    %v335 = vpop.f32.mrf.mxu0
    %v336 = vadd.f32 0.0, %v335
    %337 = vdwg.mxu0
    %338 = vmatpush.msra.mxu0 0.0
    %339 = vmatpush.msra.mxu0 0.0
    %340 = vmatpush.msra.mxu0 0.0
    %341 = vmatpush.msra.mxu0 0.0
    %342 = vmatpush.msra.mxu0 0.0
    %343 = vmatpush.msra.mxu0 0.0
    %344 = vmatpush.msra.mxu0 0.0
    %345 = vmatpush.msra.mxu0 0.0
    %346 = vmatpush.msra.mxu0 0.0
    %347 = vmatpush.msra.mxu0 0.0
    %348 = vmatpush.msra.mxu0 0.0
    %349 = vmatpush.msra.mxu0 0.0
    %350 = vmatpush.msra.mxu0 %v310
    %351 = vmatpush.msra.mxu0 %v289
    %352 = vmatpush.msra.mxu0 %v287
    %353 = vmatpush.msra.mxu0 %v285
    %354 = vmatmul.f32.gmra.mxu0 %v300
    %v355 = vpop.f32.mrf.mxu0
    %v356 = vadd.f32 0.0, %v355
    %357 = vmatmul.f32.gmra.mxu0 %v302
    %v358 = vpop.f32.mrf.mxu0
    %v359 = vadd.f32 0.0, %v358
    %360 = vmatmul.f32.gmra.mxu0 %v304
    %v361 = vpop.f32.mrf.mxu0
    %v362 = vadd.f32 0.0, %v361
    %363 = vdwg.mxu0
    %v364 = vadd.f32 %v277, %v330
    %v365 = vadd.f32 %v278, %v356
    %v366 = vadd.f32 %v279, %v333
    %v367 = vadd.f32 %v280, %v359
    %v368 = vadd.f32 %v281, %v336
    %v369 = vadd.f32 %v282, %v362
    %s370 = scalar_lea.vmem %s1, 256
    %v371 = vld [vmem:[%s370] sm:$0xff]
    %v372 = vld [vmem:[%s370 + $0x8] sm:$0xff]
    %v373 = vld [vmem:[%s370 + $0x10] sm:$0xff]
    %v374 = vld [vmem:[%s370 + $0x18] sm:$0xff]
    %v375 = vld [vmem:[%s370 + $0x20] sm:$0xff]
    %v376 = vld [vmem:[%s370 + $0x28] sm:$0xff]
    %v377 = vld [vmem:[%s370 + $0x30] sm:$0xf]
    %v378 = vld [vmem:[%s370 + $0x38] sm:$0xf]
    %v379 = vrot.slane %v33, 4
    %v380 = vrot.slane %v34, 4
    %v381 = vsel %vm73, %v379, %v380
    %v382 = vrot.slane %v35, 4
    %v383 = vsel %vm73, %v380, %v382
    %v384 = vrot.slane %v36, 4
    %v385 = vsel %vm73, %v382, %v384
    %v386 = vsel %vm66, %v381, 0
    %v388 = vsel %vm66, %v383, 0
    %v390 = vsel %vm66, %v385, 0
    %v393 = vsel %vm73, %v377, 0
    %v396 = vsel %vm73, %v378, 0
    %398 = vmatpush.msra.mxu0 0.0
    %399 = vmatpush.msra.mxu0 0.0
    %400 = vmatpush.msra.mxu0 0.0
    %401 = vmatpush.msra.mxu0 0.0
    %402 = vmatpush.msra.mxu0 0.0
    %403 = vmatpush.msra.mxu0 0.0
    %404 = vmatpush.msra.mxu0 0.0
    %405 = vmatpush.msra.mxu0 0.0
    %406 = vmatpush.msra.mxu0 0.0
    %407 = vmatpush.msra.mxu0 0.0
    %408 = vmatpush.msra.mxu0 0.0
    %409 = vmatpush.msra.mxu0 0.0
    %410 = vmatpush.msra.mxu0 %v393
    %411 = vmatpush.msra.mxu0 %v375
    %412 = vmatpush.msra.mxu0 %v373
    %413 = vmatpush.msra.mxu0 %v371
    %414 = vmatmul.f32.gmra.mxu0 %v386
    %v415 = vpop.f32.mrf.mxu0
    %v416 = vadd.f32 0.0, %v415
    %417 = vmatmul.f32.gmra.mxu0 %v388
    %v418 = vpop.f32.mrf.mxu0
    %v419 = vadd.f32 0.0, %v418
    %420 = vmatmul.f32.gmra.mxu0 %v390
    %v421 = vpop.f32.mrf.mxu0
    %v422 = vadd.f32 0.0, %v421
    %423 = vdwg.mxu0
    %424 = vmatpush.msra.mxu0 0.0
    %425 = vmatpush.msra.mxu0 0.0
    %426 = vmatpush.msra.mxu0 0.0
    %427 = vmatpush.msra.mxu0 0.0
    %428 = vmatpush.msra.mxu0 0.0
    %429 = vmatpush.msra.mxu0 0.0
    %430 = vmatpush.msra.mxu0 0.0
    %431 = vmatpush.msra.mxu0 0.0
    %432 = vmatpush.msra.mxu0 0.0
    %433 = vmatpush.msra.mxu0 0.0
    %434 = vmatpush.msra.mxu0 0.0
    %435 = vmatpush.msra.mxu0 0.0
    %436 = vmatpush.msra.mxu0 %v396
    %437 = vmatpush.msra.mxu0 %v376
    %438 = vmatpush.msra.mxu0 %v374
    %439 = vmatpush.msra.mxu0 %v372
    %440 = vmatmul.f32.gmra.mxu0 %v386
    %v441 = vpop.f32.mrf.mxu0
    %v442 = vadd.f32 0.0, %v441
    %443 = vmatmul.f32.gmra.mxu0 %v388
    %v444 = vpop.f32.mrf.mxu0
    %v445 = vadd.f32 0.0, %v444
    %446 = vmatmul.f32.gmra.mxu0 %v390
    %v447 = vpop.f32.mrf.mxu0
    %v448 = vadd.f32 0.0, %v447
    %449 = vdwg.mxu0
    %v450 = vadd.f32 %v364, %v416
    %v451 = vadd.f32 %v365, %v442
    %v452 = vadd.f32 %v366, %v419
    %v453 = vadd.f32 %v367, %v445
    %v454 = vadd.f32 %v368, %v422
    %v455 = vadd.f32 %v369, %v448
    %v456 = vld [vmem:[%s2] sm:$0x3]
    %v458 = vperm.slane %v456, 0
    %v459 = vperm.slane %v456, 1
    %v462 = vadd.f32 %v450, %v458
    %v463 = vadd.f32 %v451, %v459
    %v464 = vadd.f32 %v452, %v458
    %v465 = vadd.f32 %v453, %v459
    %v466 = vadd.f32 %v454, %v458
    %v467 = vadd.f32 %v455, %v459
    %v468 = vmax.f32 %v462, 0.0
    %v469 = vmax.f32 %v463, 0.0
    %v470 = vmax.f32 %v464, 0.0
    %v471 = vmax.f32 %v465, 0.0
    %v472 = vmax.f32 %v466, 0.0
    %v473 = vmax.f32 %v467, 0.0
    %v480 = vrot.slane %v468, 1
    %v481 = vrot.slane %v470, 1
    %v482 = vsel %vm58, %v480, %v481
    %v483 = vrot.slane %v469, 1
    %v484 = vrot.slane %v471, 1
    %v485 = vsel %vm58, %v483, %v484
    %v486 = vrot.slane %v472, 1
    %v487 = vsel %vm58, %v481, %v486
    %v488 = vrot.slane %v473, 1
    %v489 = vsel %vm58, %v484, %v488
    %v496 = vmax.f32 %v468, %v482
    %v497 = vmax.f32 %v469, %v485
    %v498 = vmax.f32 %v470, %v487
    %v499 = vmax.f32 %v471, %v489
    %v500 = vmax.f32 %v472, %v486
    %v501 = vmax.f32 %v473, %v488
    %v502 = vld [vmem:[%s3] sm:$0xff]
    %v503 = vld [vmem:[%s3 + $0x8] sm:$0xf]
    %vm504 = vcmask 187392
    %v506 = vsel %vm504, %v502, 0
    %v509 = vsel %vm504, %v503, 0
    %v512 = vsel %vm58, %v500, 0
    %v515 = vsel %vm58, %v501, 0
    %517 = vmatpush.msra.mxu0 0.0
    %518 = vmatpush.msra.mxu0 0.0
    %519 = vmatpush.msra.mxu0 0.0
    %520 = vmatpush.msra.mxu0 0.0
    %521 = vmatpush.msra.mxu0 0.0
    %522 = vmatpush.msra.mxu0 0.0
    %523 = vmatpush.msra.mxu0 0.0
    %524 = vmatpush.msra.mxu0 0.0
    %525 = vmatpush.msra.mxu0 0.0
    %526 = vmatpush.msra.mxu0 0.0
    %527 = vmatpush.msra.mxu0 0.0
    %528 = vmatpush.msra.mxu0 0.0
    %529 = vmatpush.msra.mxu0 0.0
    %530 = vmatpush.msra.mxu0 %v512
    %531 = vmatpush.msra.mxu0 %v498
    %532 = vmatpush.msra.mxu0 %v496
    %533 = vmatmul.f32.gmra.mxu0 %v506
    %v534 = vpop.f32.mrf.mxu0
    %v535 = vadd.f32 0.0, %v534
    %536 = vmatmul.f32.gmra.mxu0 %v509
    %v537 = vpop.f32.mrf.mxu0
    %v538 = vadd.f32 0.0, %v537
    %539 = vdwg.mxu0
    %540 = vmatpush.msra.mxu0 0.0
    %541 = vmatpush.msra.mxu0 0.0
    %542 = vmatpush.msra.mxu0 0.0
    %543 = vmatpush.msra.mxu0 0.0
    %544 = vmatpush.msra.mxu0 0.0
    %545 = vmatpush.msra.mxu0 0.0
    %546 = vmatpush.msra.mxu0 0.0
    %547 = vmatpush.msra.mxu0 0.0
    %548 = vmatpush.msra.mxu0 0.0
    %549 = vmatpush.msra.mxu0 0.0
    %550 = vmatpush.msra.mxu0 0.0
    %551 = vmatpush.msra.mxu0 0.0
    %552 = vmatpush.msra.mxu0 0.0
    %553 = vmatpush.msra.mxu0 %v515
    %554 = vmatpush.msra.mxu0 %v499
    %555 = vmatpush.msra.mxu0 %v497
    %556 = vmatmul.f32.gmra.mxu0 %v506
    %v557 = vpop.f32.mrf.mxu0
    %v558 = vadd.f32 0.0, %v557
    %559 = vmatmul.f32.gmra.mxu0 %v509
    %v560 = vpop.f32.mrf.mxu0
    %v561 = vadd.f32 0.0, %v560
    %562 = vdwg.mxu0
    %567 = vrot.lane.b32.xlu0 %v535, 118
    %v568 = vpop.permute.xlu0 %567
    %569 = vrot.lane.b32.xlu0 %v558, 118
    %v570 = vpop.permute.xlu0 %569
    %571 = vrot.lane.b32.xlu0 %v538, 118
    %v572 = vpop.permute.xlu0 %571
    %573 = vrot.lane.b32.xlu0 %v561, 118
    %v574 = vpop.permute.xlu0 %573
    %vm575 = vcmask 965632
    %v576 = vsel %vm575, %v568, %v570
    %v577 = vsel %vm575, %v572, %v574
    %v582 = vmax.f32 %v535, %v576
    %v583 = vmax.f32 %v558, %v570
    %v584 = vmax.f32 %v538, %v577
    %v585 = vmax.f32 %v561, %v574
    %v586 = vld [vmem:[%s4] sm:$0xff]
    %v587 = vld [vmem:[%s4 + $0x8] sm:$0xff]
    %v588 = vld [vmem:[%s4 + $0x10] sm:$0xff]
    %v589 = vld [vmem:[%s4 + $0x18] sm:$0xff]
    %v590 = vld [vmem:[%s4 + $0x20] sm:$0xff]
    %v591 = vld [vmem:[%s4 + $0x28] sm:$0xff]
    %v592 = vld [vmem:[%s4 + $0x30] sm:$0xff]
    %v593 = vld [vmem:[%s4 + $0x38] sm:$0xff]
    %v594 = vld [vmem:[%s4 + $0x40] sm:$0xff]
    %v595 = vld [vmem:[%s4 + $0x48] sm:$0xff]
    %v596 = vld [vmem:[%s4 + $0x50] sm:$0xff]
    %v597 = vld [vmem:[%s4 + $0x58] sm:$0xff]
    %v598 = vld [vmem:[%s4 + $0x60] sm:$0xff]
    %v599 = vld [vmem:[%s4 + $0x68] sm:$0xff]
    %v600 = vld [vmem:[%s4 + $0x70] sm:$0xff]
    %v601 = vld [vmem:[%s4 + $0x78] sm:$0xff]
    %v602 = vld [vmem:[%s4 + $0x80] sm:$0xff]
    %v603 = vld [vmem:[%s4 + $0x88] sm:$0xff]
    %v604 = vld [vmem:[%s4 + $0x90] sm:$0xff]
    %v605 = vld [vmem:[%s4 + $0x98] sm:$0xff]
    %v606 = vld [vmem:[%s4 + $0xa0] sm:$0xff]
    %v607 = vld [vmem:[%s4 + $0xa8] sm:$0xff]
    %v608 = vld [vmem:[%s4 + $0xb0] sm:$0xff]
    %v609 = vld [vmem:[%s4 + $0xb8] sm:$0xff]
    %v610 = vld [vmem:[%s4 + $0xc0] sm:$0xff]
    %v611 = vld [vmem:[%s4 + $0xc8] sm:$0xff]
    %v612 = vld [vmem:[%s4 + $0xd0] sm:$0xff]
    %v613 = vld [vmem:[%s4 + $0xd8] sm:$0xff]
    %v614 = vld [vmem:[%s4 + $0xe0] sm:$0x3f]
    %vm615 = vcmask 834560
    %v617 = vsel %vm615, %v583, 0
    %v620 = vsel %vm615, %v585, 0
    %v623 = vsel %vm205, %v614, 0
    %625 = vmatpush.msra.mxu0 %v601
    %626 = vmatpush.msra.mxu0 %v600
    %627 = vmatpush.msra.mxu0 %v599
    %628 = vmatpush.msra.mxu0 %v598
    %629 = vmatpush.msra.mxu0 %v597
    %630 = vmatpush.msra.mxu0 %v596
    %631 = vmatpush.msra.mxu0 %v595
    %632 = vmatpush.msra.mxu0 %v594
    %633 = vmatpush.msra.mxu0 %v593
    %634 = vmatpush.msra.mxu0 %v592
    %635 = vmatpush.msra.mxu0 %v591
    %636 = vmatpush.msra.mxu0 %v590
    %637 = vmatpush.msra.mxu0 %v589
    %638 = vmatpush.msra.mxu0 %v588
    %639 = vmatpush.msra.mxu0 %v587
    %640 = vmatpush.msra.mxu0 %v586
    %641 = vmatmul.f32.gmra.mxu0 %v582
    %v642 = vpop.f32.mrf.mxu0
    %v643 = vadd.f32 0.0, %v642
    %644 = vmatmul.f32.gmra.mxu0 %v584
    %v645 = vpop.f32.mrf.mxu0
    %v646 = vadd.f32 0.0, %v645
    %647 = vdwg.mxu0
    %648 = vmatpush.msra.mxu0 0.0
    %649 = vmatpush.msra.mxu0 0.0
    %650 = vmatpush.msra.mxu0 0.0
    %651 = vmatpush.msra.mxu0 %v623
    %652 = vmatpush.msra.mxu0 %v613
    %653 = vmatpush.msra.mxu0 %v612
    %654 = vmatpush.msra.mxu0 %v611
    %655 = vmatpush.msra.mxu0 %v610
    %656 = vmatpush.msra.mxu0 %v609
    %657 = vmatpush.msra.mxu0 %v608
    %658 = vmatpush.msra.mxu0 %v607
    %659 = vmatpush.msra.mxu0 %v606
    %660 = vmatpush.msra.mxu0 %v605
    %661 = vmatpush.msra.mxu0 %v604
    %662 = vmatpush.msra.mxu0 %v603
    %663 = vmatpush.msra.mxu0 %v602
    %664 = vmatmul.f32.gmra.mxu0 %v617
    %v665 = vpop.f32.mrf.mxu0
    %v666 = vadd.f32 %v643, %v665
    %667 = vmatmul.f32.gmra.mxu0 %v620
    %v668 = vpop.f32.mrf.mxu0
    %v669 = vadd.f32 %v646, %v668
    %670 = vdwg.mxu0
    %v671 = vld [vmem:[%s5] sm:$0xff]
    %v672 = vld [vmem:[%s5 + $0x8] sm:$0xff]
    %v673 = vld [vmem:[%s5 + $0x10] sm:$0xff]
    %v674 = vld [vmem:[%s5 + $0x18] sm:$0xff]
    %v675 = vld [vmem:[%s5 + $0x20] sm:$0xff]
    %v676 = vld [vmem:[%s5 + $0x28] sm:$0xff]
    %v677 = vld [vmem:[%s5 + $0x30] sm:$0xff]
    %v678 = vld [vmem:[%s5 + $0x38] sm:$0xff]
    %v679 = vld [vmem:[%s5 + $0x40] sm:$0xff]
    %v680 = vld [vmem:[%s5 + $0x48] sm:$0xff]
    %v681 = vld [vmem:[%s5 + $0x50] sm:$0xff]
    %v682 = vld [vmem:[%s5 + $0x58] sm:$0xff]
    %v683 = vld [vmem:[%s5 + $0x60] sm:$0xff]
    %v684 = vld [vmem:[%s5 + $0x68] sm:$0xff]
    %v685 = vld [vmem:[%s5 + $0x70] sm:$0xff]
    %v686 = vld [vmem:[%s5 + $0x78] sm:$0xff]
    %v687 = vld [vmem:[%s5 + $0x80] sm:$0xff]
    %v688 = vld [vmem:[%s5 + $0x88] sm:$0xff]
    %v689 = vld [vmem:[%s5 + $0x90] sm:$0xff]
    %v690 = vld [vmem:[%s5 + $0x98] sm:$0xff]
    %v691 = vld [vmem:[%s5 + $0xa0] sm:$0xff]
    %v692 = vld [vmem:[%s5 + $0xa8] sm:$0xff]
    %v693 = vld [vmem:[%s5 + $0xb0] sm:$0xff]
    %v694 = vld [vmem:[%s5 + $0xb8] sm:$0xff]
    %v695 = vld [vmem:[%s5 + $0xc0] sm:$0xff]
    %v696 = vld [vmem:[%s5 + $0xc8] sm:$0xff]
    %v697 = vld [vmem:[%s5 + $0xd0] sm:$0xff]
    %v698 = vld [vmem:[%s5 + $0xd8] sm:$0xff]
    %v699 = vld [vmem:[%s5 + $0xe0] sm:$0xff]
    %v700 = vld [vmem:[%s5 + $0xe8] sm:$0xff]
    %s701 = scalar_lea.vmem %s5, 240
    %v702 = vld [vmem:[%s701] sm:$0xff]
    %v703 = vld [vmem:[%s701 + $0x8] sm:$0xff]
    %v704 = vld [vmem:[%s701 + $0x10] sm:$0xff]
    %v705 = vld [vmem:[%s701 + $0x18] sm:$0xff]
    %v706 = vld [vmem:[%s701 + $0x20] sm:$0xff]
    %v707 = vld [vmem:[%s701 + $0x28] sm:$0xff]
    %v708 = vld [vmem:[%s701 + $0x30] sm:$0xff]
    %v709 = vld [vmem:[%s701 + $0x38] sm:$0xff]
    %v710 = vld [vmem:[%s701 + $0x40] sm:$0xff]
    %v711 = vld [vmem:[%s701 + $0x48] sm:$0xff]
    %v712 = vld [vmem:[%s701 + $0x50] sm:$0xff]
    %v713 = vld [vmem:[%s701 + $0x58] sm:$0xff]
    %v714 = vld [vmem:[%s701 + $0x60] sm:$0xff]
    %v715 = vld [vmem:[%s701 + $0x68] sm:$0xff]
    %v716 = vld [vmem:[%s701 + $0x70] sm:$0xff]
    %v717 = vld [vmem:[%s701 + $0x78] sm:$0xff]
    %v718 = vld [vmem:[%s701 + $0x80] sm:$0xff]
    %v719 = vld [vmem:[%s701 + $0x88] sm:$0xff]
    %v720 = vld [vmem:[%s701 + $0x90] sm:$0xff]
    %v721 = vld [vmem:[%s701 + $0x98] sm:$0xff]
    %v722 = vld [vmem:[%s701 + $0xa0] sm:$0xff]
    %v723 = vld [vmem:[%s701 + $0xa8] sm:$0xff]
    %v724 = vld [vmem:[%s701 + $0xb0] sm:$0xff]
    %v725 = vld [vmem:[%s701 + $0xb8] sm:$0xff]
    %v726 = vld [vmem:[%s701 + $0xc0] sm:$0xff]
    %v727 = vld [vmem:[%s701 + $0xc8] sm:$0xff]
    %v728 = vld [vmem:[%s701 + $0xd0] sm:$0xff]
    %v729 = vld [vmem:[%s701 + $0xd8] sm:$0xff]
    %v730 = vld [vmem:[%s701 + $0xe0] sm:$0xff]
    %v731 = vld [vmem:[%s701 + $0xe8] sm:$0xff]
    %v734 = vrot.slane %v666, 1
    %v735 = vrot.slane %v669, 1
    %v736 = vsel %vm58, %v734, %v735
    %vm737 = vcmask 982016
    %v738 = vsel %vm737, %v736, 0
    %740 = vmatpush.msra.mxu0 0.0
    %741 = vmatpush.msra.mxu0 %v730
    %742 = vmatpush.msra.mxu0 %v728
    %743 = vmatpush.msra.mxu0 %v726
    %744 = vmatpush.msra.mxu0 %v724
    %745 = vmatpush.msra.mxu0 %v722
    %746 = vmatpush.msra.mxu0 %v720
    %747 = vmatpush.msra.mxu0 %v718
    %748 = vmatpush.msra.mxu0 %v716
    %749 = vmatpush.msra.mxu0 %v714
    %750 = vmatpush.msra.mxu0 %v712
    %751 = vmatpush.msra.mxu0 %v710
    %752 = vmatpush.msra.mxu0 %v708
    %753 = vmatpush.msra.mxu0 %v706
    %754 = vmatpush.msra.mxu0 %v704
    %755 = vmatpush.msra.mxu0 %v702
    %756 = vmatmul.f32.gmra.mxu0 %v738
    %v757 = vpop.f32.mrf.mxu0
    %v758 = vadd.f32 0.0, %v757
    %759 = vdwg.mxu0
    %760 = vmatpush.msra.mxu0 0.0
    %761 = vmatpush.msra.mxu0 %v731
    %762 = vmatpush.msra.mxu0 %v729
    %763 = vmatpush.msra.mxu0 %v727
    %764 = vmatpush.msra.mxu0 %v725
    %765 = vmatpush.msra.mxu0 %v723
    %766 = vmatpush.msra.mxu0 %v721
    %767 = vmatpush.msra.mxu0 %v719
    %768 = vmatpush.msra.mxu0 %v717
    %769 = vmatpush.msra.mxu0 %v715
    %770 = vmatpush.msra.mxu0 %v713
    %771 = vmatpush.msra.mxu0 %v711
    %772 = vmatpush.msra.mxu0 %v709
    %773 = vmatpush.msra.mxu0 %v707
    %774 = vmatpush.msra.mxu0 %v705
    %775 = vmatpush.msra.mxu0 %v703
    %776 = vmatmul.f32.gmra.mxu0 %v738
    %v777 = vpop.f32.mrf.mxu0
    %v778 = vadd.f32 0.0, %v777
    %779 = vdwg.mxu0
    %v780 = vsel %vm737, %v666, 0
    %782 = vmatpush.msra.mxu0 0.0
    %783 = vmatpush.msra.mxu0 %v699
    %784 = vmatpush.msra.mxu0 %v697
    %785 = vmatpush.msra.mxu0 %v695
    %786 = vmatpush.msra.mxu0 %v693
    %787 = vmatpush.msra.mxu0 %v691
    %788 = vmatpush.msra.mxu0 %v689
    %789 = vmatpush.msra.mxu0 %v687
    %790 = vmatpush.msra.mxu0 %v685
    %791 = vmatpush.msra.mxu0 %v683
    %792 = vmatpush.msra.mxu0 %v681
    %793 = vmatpush.msra.mxu0 %v679
    %794 = vmatpush.msra.mxu0 %v677
    %795 = vmatpush.msra.mxu0 %v675
    %796 = vmatpush.msra.mxu0 %v673
    %797 = vmatpush.msra.mxu0 %v671
    %798 = vmatmul.f32.gmra.mxu0 %v780
    %v799 = vpop.f32.mrf.mxu0
    %v800 = vadd.f32 %v758, %v799
    %801 = vdwg.mxu0
    %802 = vmatpush.msra.mxu0 0.0
    %803 = vmatpush.msra.mxu0 %v700
    %804 = vmatpush.msra.mxu0 %v698
    %805 = vmatpush.msra.mxu0 %v696
    %806 = vmatpush.msra.mxu0 %v694
    %807 = vmatpush.msra.mxu0 %v692
    %808 = vmatpush.msra.mxu0 %v690
    %809 = vmatpush.msra.mxu0 %v688
    %810 = vmatpush.msra.mxu0 %v686
    %811 = vmatpush.msra.mxu0 %v684
    %812 = vmatpush.msra.mxu0 %v682
    %813 = vmatpush.msra.mxu0 %v680
    %814 = vmatpush.msra.mxu0 %v678
    %815 = vmatpush.msra.mxu0 %v676
    %816 = vmatpush.msra.mxu0 %v674
    %817 = vmatpush.msra.mxu0 %v672
    %818 = vmatmul.f32.gmra.mxu0 %v780
    %v819 = vpop.f32.mrf.mxu0
    %v820 = vadd.f32 %v778, %v819
    %821 = vdwg.mxu0
    %s822 = scalar_lea.vmem %s5, 480
    %v823 = vld [vmem:[%s822] sm:$0xff]
    %v824 = vld [vmem:[%s822 + $0x8] sm:$0xff]
    %v825 = vld [vmem:[%s822 + $0x10] sm:$0xff]
    %v826 = vld [vmem:[%s822 + $0x18] sm:$0xff]
    %v827 = vld [vmem:[%s822 + $0x20] sm:$0xff]
    %v828 = vld [vmem:[%s822 + $0x28] sm:$0xff]
    %v829 = vld [vmem:[%s822 + $0x30] sm:$0xff]
    %v830 = vld [vmem:[%s822 + $0x38] sm:$0xff]
    %v831 = vld [vmem:[%s822 + $0x40] sm:$0xff]
    %v832 = vld [vmem:[%s822 + $0x48] sm:$0xff]
    %v833 = vld [vmem:[%s822 + $0x50] sm:$0xff]
    %v834 = vld [vmem:[%s822 + $0x58] sm:$0xff]
    %v835 = vld [vmem:[%s822 + $0x60] sm:$0xff]
    %v836 = vld [vmem:[%s822 + $0x68] sm:$0xff]
    %v837 = vld [vmem:[%s822 + $0x70] sm:$0xff]
    %v838 = vld [vmem:[%s822 + $0x78] sm:$0xff]
    %v839 = vld [vmem:[%s822 + $0x80] sm:$0xff]
    %v840 = vld [vmem:[%s822 + $0x88] sm:$0xff]
    %v841 = vld [vmem:[%s822 + $0x90] sm:$0xff]
    %v842 = vld [vmem:[%s822 + $0x98] sm:$0xff]
    %v843 = vld [vmem:[%s822 + $0xa0] sm:$0xff]
    %v844 = vld [vmem:[%s822 + $0xa8] sm:$0xff]
    %v845 = vld [vmem:[%s822 + $0xb0] sm:$0xff]
    %v846 = vld [vmem:[%s822 + $0xb8] sm:$0xff]
    %v847 = vld [vmem:[%s822 + $0xc0] sm:$0xff]
    %v848 = vld [vmem:[%s822 + $0xc8] sm:$0xff]
    %v849 = vld [vmem:[%s822 + $0xd0] sm:$0xff]
    %v850 = vld [vmem:[%s822 + $0xd8] sm:$0xff]
    %v851 = vld [vmem:[%s822 + $0xe0] sm:$0xff]
    %v852 = vld [vmem:[%s822 + $0xe8] sm:$0xff]
    %v853 = vrot.slane %v666, 2
    %v854 = vrot.slane %v669, 2
    %v855 = vsel %vm205, %v853, %v854
    %v856 = vsel %vm737, %v855, 0
    %858 = vmatpush.msra.mxu0 0.0
    %859 = vmatpush.msra.mxu0 %v851
    %860 = vmatpush.msra.mxu0 %v849
    %861 = vmatpush.msra.mxu0 %v847
    %862 = vmatpush.msra.mxu0 %v845
    %863 = vmatpush.msra.mxu0 %v843
    %864 = vmatpush.msra.mxu0 %v841
    %865 = vmatpush.msra.mxu0 %v839
    %866 = vmatpush.msra.mxu0 %v837
    %867 = vmatpush.msra.mxu0 %v835
    %868 = vmatpush.msra.mxu0 %v833
    %869 = vmatpush.msra.mxu0 %v831
    %870 = vmatpush.msra.mxu0 %v829
    %871 = vmatpush.msra.mxu0 %v827
    %872 = vmatpush.msra.mxu0 %v825
    %873 = vmatpush.msra.mxu0 %v823
    %874 = vmatmul.f32.gmra.mxu0 %v856
    %v875 = vpop.f32.mrf.mxu0
    %v876 = vadd.f32 0.0, %v875
    %877 = vdwg.mxu0
    %878 = vmatpush.msra.mxu0 0.0
    %879 = vmatpush.msra.mxu0 %v852
    %880 = vmatpush.msra.mxu0 %v850
    %881 = vmatpush.msra.mxu0 %v848
    %882 = vmatpush.msra.mxu0 %v846
    %883 = vmatpush.msra.mxu0 %v844
    %884 = vmatpush.msra.mxu0 %v842
    %885 = vmatpush.msra.mxu0 %v840
    %886 = vmatpush.msra.mxu0 %v838
    %887 = vmatpush.msra.mxu0 %v836
    %888 = vmatpush.msra.mxu0 %v834
    %889 = vmatpush.msra.mxu0 %v832
    %890 = vmatpush.msra.mxu0 %v830
    %891 = vmatpush.msra.mxu0 %v828
    %892 = vmatpush.msra.mxu0 %v826
    %893 = vmatpush.msra.mxu0 %v824
    %894 = vmatmul.f32.gmra.mxu0 %v856
    %v895 = vpop.f32.mrf.mxu0
    %v896 = vadd.f32 0.0, %v895
    %897 = vdwg.mxu0
    %v898 = vadd.f32 %v800, %v876
    %v899 = vadd.f32 %v820, %v896
    %s900 = scalar_lea.vmem %s5, 720
    %v901 = vld [vmem:[%s900] sm:$0xff]
    %v902 = vld [vmem:[%s900 + $0x8] sm:$0xff]
    %v903 = vld [vmem:[%s900 + $0x10] sm:$0xff]
    %v904 = vld [vmem:[%s900 + $0x18] sm:$0xff]
    %v905 = vld [vmem:[%s900 + $0x20] sm:$0xff]
    %v906 = vld [vmem:[%s900 + $0x28] sm:$0xff]
    %v907 = vld [vmem:[%s900 + $0x30] sm:$0xff]
    %v908 = vld [vmem:[%s900 + $0x38] sm:$0xff]
    %v909 = vld [vmem:[%s900 + $0x40] sm:$0xff]
    %v910 = vld [vmem:[%s900 + $0x48] sm:$0xff]
    %v911 = vld [vmem:[%s900 + $0x50] sm:$0xff]
    %v912 = vld [vmem:[%s900 + $0x58] sm:$0xff]
    %v913 = vld [vmem:[%s900 + $0x60] sm:$0xff]
    %v914 = vld [vmem:[%s900 + $0x68] sm:$0xff]
    %v915 = vld [vmem:[%s900 + $0x70] sm:$0xff]
    %v916 = vld [vmem:[%s900 + $0x78] sm:$0xff]
    %v917 = vld [vmem:[%s900 + $0x80] sm:$0xff]
    %v918 = vld [vmem:[%s900 + $0x88] sm:$0xff]
    %v919 = vld [vmem:[%s900 + $0x90] sm:$0xff]
    %v920 = vld [vmem:[%s900 + $0x98] sm:$0xff]
    %v921 = vld [vmem:[%s900 + $0xa0] sm:$0xff]
    %v922 = vld [vmem:[%s900 + $0xa8] sm:$0xff]
    %v923 = vld [vmem:[%s900 + $0xb0] sm:$0xff]
    %v924 = vld [vmem:[%s900 + $0xb8] sm:$0xff]
    %v925 = vld [vmem:[%s900 + $0xc0] sm:$0xff]
    %v926 = vld [vmem:[%s900 + $0xc8] sm:$0xff]
    %v927 = vld [vmem:[%s900 + $0xd0] sm:$0xff]
    %v928 = vld [vmem:[%s900 + $0xd8] sm:$0xff]
    %v929 = vld [vmem:[%s900 + $0xe0] sm:$0xff]
    %v930 = vld [vmem:[%s900 + $0xe8] sm:$0xff]
    %v931 = vrot.slane %v666, 3
    %v932 = vrot.slane %v669, 3
    %v933 = vsel %vm292, %v931, %v932
    %v934 = vsel %vm737, %v933, 0
    %936 = vmatpush.msra.mxu0 0.0
    %937 = vmatpush.msra.mxu0 %v929
    %938 = vmatpush.msra.mxu0 %v927
    %939 = vmatpush.msra.mxu0 %v925
    %940 = vmatpush.msra.mxu0 %v923
    %941 = vmatpush.msra.mxu0 %v921
    %942 = vmatpush.msra.mxu0 %v919
    %943 = vmatpush.msra.mxu0 %v917
    %944 = vmatpush.msra.mxu0 %v915
    %945 = vmatpush.msra.mxu0 %v913
    %946 = vmatpush.msra.mxu0 %v911
    %947 = vmatpush.msra.mxu0 %v909
    %948 = vmatpush.msra.mxu0 %v907
    %949 = vmatpush.msra.mxu0 %v905
    %950 = vmatpush.msra.mxu0 %v903
    %951 = vmatpush.msra.mxu0 %v901
    %952 = vmatmul.f32.gmra.mxu0 %v934
    %v953 = vpop.f32.mrf.mxu0
    %v954 = vadd.f32 0.0, %v953
    %955 = vdwg.mxu0
    %956 = vmatpush.msra.mxu0 0.0
    %957 = vmatpush.msra.mxu0 %v930
    %958 = vmatpush.msra.mxu0 %v928
    %959 = vmatpush.msra.mxu0 %v926
    %960 = vmatpush.msra.mxu0 %v924
    %961 = vmatpush.msra.mxu0 %v922
    %962 = vmatpush.msra.mxu0 %v920
    %963 = vmatpush.msra.mxu0 %v918
    %964 = vmatpush.msra.mxu0 %v916
    %965 = vmatpush.msra.mxu0 %v914
    %966 = vmatpush.msra.mxu0 %v912
    %967 = vmatpush.msra.mxu0 %v910
    %968 = vmatpush.msra.mxu0 %v908
    %969 = vmatpush.msra.mxu0 %v906
    %970 = vmatpush.msra.mxu0 %v904
    %971 = vmatpush.msra.mxu0 %v902
    %972 = vmatmul.f32.gmra.mxu0 %v934
    %v973 = vpop.f32.mrf.mxu0
    %v974 = vadd.f32 0.0, %v973
    %975 = vdwg.mxu0
    %v976 = vadd.f32 %v898, %v954
    %v977 = vadd.f32 %v899, %v974
    %s978 = scalar_lea.vmem %s5, 960
    %v979 = vld [vmem:[%s978] sm:$0xff]
    %v980 = vld [vmem:[%s978 + $0x8] sm:$0xff]
    %v981 = vld [vmem:[%s978 + $0x10] sm:$0xff]
    %v982 = vld [vmem:[%s978 + $0x18] sm:$0xff]
    %v983 = vld [vmem:[%s978 + $0x20] sm:$0xff]
    %v984 = vld [vmem:[%s978 + $0x28] sm:$0xff]
    %v985 = vld [vmem:[%s978 + $0x30] sm:$0xff]
    %v986 = vld [vmem:[%s978 + $0x38] sm:$0xff]
    %v987 = vld [vmem:[%s978 + $0x40] sm:$0xff]
    %v988 = vld [vmem:[%s978 + $0x48] sm:$0xff]
    %v989 = vld [vmem:[%s978 + $0x50] sm:$0xff]
    %v990 = vld [vmem:[%s978 + $0x58] sm:$0xff]
    %v991 = vld [vmem:[%s978 + $0x60] sm:$0xff]
    %v992 = vld [vmem:[%s978 + $0x68] sm:$0xff]
    %v993 = vld [vmem:[%s978 + $0x70] sm:$0xff]
    %v994 = vld [vmem:[%s978 + $0x78] sm:$0xff]
    %v995 = vld [vmem:[%s978 + $0x80] sm:$0xff]
    %v996 = vld [vmem:[%s978 + $0x88] sm:$0xff]
    %v997 = vld [vmem:[%s978 + $0x90] sm:$0xff]
    %v998 = vld [vmem:[%s978 + $0x98] sm:$0xff]
    %v999 = vld [vmem:[%s978 + $0xa0] sm:$0xff]
    %v1000 = vld [vmem:[%s978 + $0xa8] sm:$0xff]
    %v1001 = vld [vmem:[%s978 + $0xb0] sm:$0xff]
    %v1002 = vld [vmem:[%s978 + $0xb8] sm:$0xff]
    %v1003 = vld [vmem:[%s978 + $0xc0] sm:$0xff]
    %v1004 = vld [vmem:[%s978 + $0xc8] sm:$0xff]
    %v1005 = vld [vmem:[%s978 + $0xd0] sm:$0xff]
    %v1006 = vld [vmem:[%s978 + $0xd8] sm:$0xff]
    %v1007 = vld [vmem:[%s978 + $0xe0] sm:$0xff]
    %v1008 = vld [vmem:[%s978 + $0xe8] sm:$0xff]
    %v1009 = vrot.slane %v666, 4
    %v1010 = vrot.slane %v669, 4
    %v1011 = vsel %vm73, %v1009, %v1010
    %v1012 = vsel %vm737, %v1011, 0
    %1014 = vmatpush.msra.mxu0 0.0
    %1015 = vmatpush.msra.mxu0 %v1007
    %1016 = vmatpush.msra.mxu0 %v1005
    %1017 = vmatpush.msra.mxu0 %v1003
    %1018 = vmatpush.msra.mxu0 %v1001
    %1019 = vmatpush.msra.mxu0 %v999
    %1020 = vmatpush.msra.mxu0 %v997
    %1021 = vmatpush.msra.mxu0 %v995
    %1022 = vmatpush.msra.mxu0 %v993
    %1023 = vmatpush.msra.mxu0 %v991
    %1024 = vmatpush.msra.mxu0 %v989
    %1025 = vmatpush.msra.mxu0 %v987
    %1026 = vmatpush.msra.mxu0 %v985
    %1027 = vmatpush.msra.mxu0 %v983
    %1028 = vmatpush.msra.mxu0 %v981
    %1029 = vmatpush.msra.mxu0 %v979
    %1030 = vmatmul.f32.gmra.mxu0 %v1012
    %v1031 = vpop.f32.mrf.mxu0
    %v1032 = vadd.f32 0.0, %v1031
    %1033 = vdwg.mxu0
    %1034 = vmatpush.msra.mxu0 0.0
    %1035 = vmatpush.msra.mxu0 %v1008
    %1036 = vmatpush.msra.mxu0 %v1006
    %1037 = vmatpush.msra.mxu0 %v1004
    %1038 = vmatpush.msra.mxu0 %v1002
    %1039 = vmatpush.msra.mxu0 %v1000
    %1040 = vmatpush.msra.mxu0 %v998
    %1041 = vmatpush.msra.mxu0 %v996
    %1042 = vmatpush.msra.mxu0 %v994
    %1043 = vmatpush.msra.mxu0 %v992
    %1044 = vmatpush.msra.mxu0 %v990
    %1045 = vmatpush.msra.mxu0 %v988
    %1046 = vmatpush.msra.mxu0 %v986
    %1047 = vmatpush.msra.mxu0 %v984
    %1048 = vmatpush.msra.mxu0 %v982
    %1049 = vmatpush.msra.mxu0 %v980
    %1050 = vmatmul.f32.gmra.mxu0 %v1012
    %v1051 = vpop.f32.mrf.mxu0
    %v1052 = vadd.f32 0.0, %v1051
    %1053 = vdwg.mxu0
    %v1054 = vadd.f32 %v976, %v1032
    %v1055 = vadd.f32 %v977, %v1052
    %v1056 = vld [vmem:[%s6] sm:$0x3]
    %v1058 = vperm.slane %v1056, 0
    %v1059 = vperm.slane %v1056, 1
    %v1062 = vadd.f32 %v1054, %v1058
    %v1063 = vadd.f32 %v1055, %v1059
    %v1064 = vmax.f32 %v1062, 0.0
    %v1065 = vmax.f32 %v1063, 0.0
    %v1068 = vrot.slane %v1064, 1
    %v1069 = vrot.slane %v1065, 1
    %v1072 = vmax.f32 %v1064, %v1068
    %v1073 = vmax.f32 %v1065, %v1069
    %1076 = vrot.lane.b32.xlu0 %v1072, 108
    %v1077 = vpop.permute.xlu0 %1076
    %1078 = vrot.lane.b32.xlu0 %v1073, 108
    %v1079 = vpop.permute.xlu0 %1078
    %vm1080 = vcmask 883712
    %v1081 = vsel %vm1080, %v1077, %v1079
    %v1084 = vmax.f32 %v1072, %v1081
    %v1085 = vmax.f32 %v1073, %v1079
    %v1086 = vld [vmem:[%s8] sm:$0x1]
    %v1087 = vld [vmem:[%s7] sm:$0xff]
    %v1088 = vld [vmem:[%s7 + $0x8] sm:$0xff]
    %v1089 = vld [vmem:[%s7 + $0x10] sm:$0xff]
    %v1090 = vld [vmem:[%s7 + $0x18] sm:$0xff]
    %v1091 = vld [vmem:[%s7 + $0x20] sm:$0xff]
    %v1092 = vld [vmem:[%s7 + $0x28] sm:$0xff]
    %v1093 = vld [vmem:[%s7 + $0x30] sm:$0xff]
    %v1094 = vld [vmem:[%s7 + $0x38] sm:$0xff]
    %v1095 = vld [vmem:[%s7 + $0x40] sm:$0xff]
    %v1096 = vld [vmem:[%s7 + $0x48] sm:$0xff]
    %v1097 = vld [vmem:[%s7 + $0x50] sm:$0xff]
    %v1098 = vld [vmem:[%s7 + $0x58] sm:$0xff]
    %v1099 = vld [vmem:[%s7 + $0x60] sm:$0xff]
    %v1100 = vld [vmem:[%s7 + $0x68] sm:$0xff]
    %v1101 = vld [vmem:[%s7 + $0x70] sm:$0xff]
    %v1102 = vld [vmem:[%s7 + $0x78] sm:$0xff]
    %v1103 = vld [vmem:[%s7 + $0x80] sm:$0xff]
    %v1104 = vld [vmem:[%s7 + $0x88] sm:$0xf]
    %vm1105 = vcmask 97280
    %v1107 = vsel %vm1105, %v1085, 0
    %v1110 = vsel %vm73, %v1104, 0
    %1112 = vmatpush.msra.mxu0 %v1102
    %1113 = vmatpush.msra.mxu0 %v1101
    %1114 = vmatpush.msra.mxu0 %v1100
    %1115 = vmatpush.msra.mxu0 %v1099
    %1116 = vmatpush.msra.mxu0 %v1098
    %1117 = vmatpush.msra.mxu0 %v1097
    %1118 = vmatpush.msra.mxu0 %v1096
    %1119 = vmatpush.msra.mxu0 %v1095
    %1120 = vmatpush.msra.mxu0 %v1094
    %1121 = vmatpush.msra.mxu0 %v1093
    %1122 = vmatpush.msra.mxu0 %v1092
    %1123 = vmatpush.msra.mxu0 %v1091
    %1124 = vmatpush.msra.mxu0 %v1090
    %1125 = vmatpush.msra.mxu0 %v1089
    %1126 = vmatpush.msra.mxu0 %v1088
    %1127 = vmatpush.msra.mxu0 %v1087
    %1128 = vmatmul.f32.gmra.mxu0 %v1084
    %v1129 = vpop.f32.mrf.mxu0
    %v1130 = vadd.f32 0.0, %v1129
    %1131 = vdwg.mxu0
    %1132 = vmatpush.msra.mxu0 0.0
    %1133 = vmatpush.msra.mxu0 0.0
    %1134 = vmatpush.msra.mxu0 0.0
    %1135 = vmatpush.msra.mxu0 0.0
    %1136 = vmatpush.msra.mxu0 0.0
    %1137 = vmatpush.msra.mxu0 0.0
    %1138 = vmatpush.msra.mxu0 0.0
    %1139 = vmatpush.msra.mxu0 0.0
    %1140 = vmatpush.msra.mxu0 0.0
    %1141 = vmatpush.msra.mxu0 0.0
    %1142 = vmatpush.msra.mxu0 0.0
    %1143 = vmatpush.msra.mxu0 0.0
    %1144 = vmatpush.msra.mxu0 0.0
    %1145 = vmatpush.msra.mxu0 0.0
    %1146 = vmatpush.msra.mxu0 %v1110
    %1147 = vmatpush.msra.mxu0 %v1103
    %1148 = vmatmul.f32.gmra.mxu0 %v1107
    %v1149 = vpop.f32.mrf.mxu0
    %v1150 = vadd.f32 %v1130, %v1149
    %1151 = vdwg.mxu0
    %v1152 = vadd.f32 %v1086, %v1150
    %s1153 = scalar_lea.vmem %s7, 144
    %v1154 = vld [vmem:[%s1153] sm:$0xff]
    %v1155 = vld [vmem:[%s1153 + $0x8] sm:$0xff]
    %v1156 = vld [vmem:[%s1153 + $0x10] sm:$0xff]
    %v1157 = vld [vmem:[%s1153 + $0x18] sm:$0xff]
    %v1158 = vld [vmem:[%s1153 + $0x20] sm:$0xff]
    %v1159 = vld [vmem:[%s1153 + $0x28] sm:$0xff]
    %v1160 = vld [vmem:[%s1153 + $0x30] sm:$0xff]
    %v1161 = vld [vmem:[%s1153 + $0x38] sm:$0xff]
    %v1162 = vld [vmem:[%s1153 + $0x40] sm:$0xff]
    %v1163 = vld [vmem:[%s1153 + $0x48] sm:$0xff]
    %v1164 = vld [vmem:[%s1153 + $0x50] sm:$0xff]
    %v1165 = vld [vmem:[%s1153 + $0x58] sm:$0xff]
    %v1166 = vld [vmem:[%s1153 + $0x60] sm:$0xff]
    %v1167 = vld [vmem:[%s1153 + $0x68] sm:$0xff]
    %v1168 = vld [vmem:[%s1153 + $0x70] sm:$0xff]
    %v1169 = vld [vmem:[%s1153 + $0x78] sm:$0xff]
    %v1170 = vld [vmem:[%s1153 + $0x80] sm:$0xff]
    %v1171 = vld [vmem:[%s1153 + $0x88] sm:$0xf]
    %v1173 = vrot.slane %v1084, 2
    %v1174 = vrot.slane %v1085, 2
    %v1176 = vsel %vm1105, %v1174, 0
    %v1179 = vsel %vm73, %v1171, 0
    %1181 = vmatpush.msra.mxu0 %v1169
    %1182 = vmatpush.msra.mxu0 %v1168
    %1183 = vmatpush.msra.mxu0 %v1167
    %1184 = vmatpush.msra.mxu0 %v1166
    %1185 = vmatpush.msra.mxu0 %v1165
    %1186 = vmatpush.msra.mxu0 %v1164
    %1187 = vmatpush.msra.mxu0 %v1163
    %1188 = vmatpush.msra.mxu0 %v1162
    %1189 = vmatpush.msra.mxu0 %v1161
    %1190 = vmatpush.msra.mxu0 %v1160
    %1191 = vmatpush.msra.mxu0 %v1159
    %1192 = vmatpush.msra.mxu0 %v1158
    %1193 = vmatpush.msra.mxu0 %v1157
    %1194 = vmatpush.msra.mxu0 %v1156
    %1195 = vmatpush.msra.mxu0 %v1155
    %1196 = vmatpush.msra.mxu0 %v1154
    %1197 = vmatmul.f32.gmra.mxu0 %v1173
    %v1198 = vpop.f32.mrf.mxu0
    %v1199 = vadd.f32 0.0, %v1198
    %1200 = vdwg.mxu0
    %1201 = vmatpush.msra.mxu0 0.0
    %1202 = vmatpush.msra.mxu0 0.0
    %1203 = vmatpush.msra.mxu0 0.0
    %1204 = vmatpush.msra.mxu0 0.0
    %1205 = vmatpush.msra.mxu0 0.0
    %1206 = vmatpush.msra.mxu0 0.0
    %1207 = vmatpush.msra.mxu0 0.0
    %1208 = vmatpush.msra.mxu0 0.0
    %1209 = vmatpush.msra.mxu0 0.0
    %1210 = vmatpush.msra.mxu0 0.0
    %1211 = vmatpush.msra.mxu0 0.0
    %1212 = vmatpush.msra.mxu0 0.0
    %1213 = vmatpush.msra.mxu0 0.0
    %1214 = vmatpush.msra.mxu0 0.0
    %1215 = vmatpush.msra.mxu0 %v1179
    %1216 = vmatpush.msra.mxu0 %v1170
    %1217 = vmatmul.f32.gmra.mxu0 %v1176
    %v1218 = vpop.f32.mrf.mxu0
    %v1219 = vadd.f32 %v1199, %v1218
    %1220 = vdwg.mxu0
    %v1221 = vadd.f32 %v1152, %v1219
    %s1222 = scalar_lea.vmem %s7, 288
    %v1223 = vld [vmem:[%s1222] sm:$0xff]
    %v1224 = vld [vmem:[%s1222 + $0x8] sm:$0xff]
    %v1225 = vld [vmem:[%s1222 + $0x10] sm:$0xff]
    %v1226 = vld [vmem:[%s1222 + $0x18] sm:$0xff]
    %v1227 = vld [vmem:[%s1222 + $0x20] sm:$0xff]
    %v1228 = vld [vmem:[%s1222 + $0x28] sm:$0xff]
    %v1229 = vld [vmem:[%s1222 + $0x30] sm:$0xff]
    %v1230 = vld [vmem:[%s1222 + $0x38] sm:$0xff]
    %v1231 = vld [vmem:[%s1222 + $0x40] sm:$0xff]
    %v1232 = vld [vmem:[%s1222 + $0x48] sm:$0xff]
    %v1233 = vld [vmem:[%s1222 + $0x50] sm:$0xff]
    %v1234 = vld [vmem:[%s1222 + $0x58] sm:$0xff]
    %v1235 = vld [vmem:[%s1222 + $0x60] sm:$0xff]
    %v1236 = vld [vmem:[%s1222 + $0x68] sm:$0xff]
    %v1237 = vld [vmem:[%s1222 + $0x70] sm:$0xff]
    %v1238 = vld [vmem:[%s1222 + $0x78] sm:$0xff]
    %v1239 = vld [vmem:[%s1222 + $0x80] sm:$0xff]
    %v1240 = vld [vmem:[%s1222 + $0x88] sm:$0xf]
    %v1241 = vrot.slane %v1084, 4
    %v1242 = vrot.slane %v1085, 4
    %v1244 = vsel %vm1105, %v1242, 0
    %v1247 = vsel %vm73, %v1240, 0
    %1249 = vmatpush.msra.mxu0 %v1238
    %1250 = vmatpush.msra.mxu0 %v1237
    %1251 = vmatpush.msra.mxu0 %v1236
    %1252 = vmatpush.msra.mxu0 %v1235
    %1253 = vmatpush.msra.mxu0 %v1234
    %1254 = vmatpush.msra.mxu0 %v1233
    %1255 = vmatpush.msra.mxu0 %v1232
    %1256 = vmatpush.msra.mxu0 %v1231
    %1257 = vmatpush.msra.mxu0 %v1230
    %1258 = vmatpush.msra.mxu0 %v1229
    %1259 = vmatpush.msra.mxu0 %v1228
    %1260 = vmatpush.msra.mxu0 %v1227
    %1261 = vmatpush.msra.mxu0 %v1226
    %1262 = vmatpush.msra.mxu0 %v1225
    %1263 = vmatpush.msra.mxu0 %v1224
    %1264 = vmatpush.msra.mxu0 %v1223
    %1265 = vmatmul.f32.gmra.mxu0 %v1241
    %v1266 = vpop.f32.mrf.mxu0
    %v1267 = vadd.f32 0.0, %v1266
    %1268 = vdwg.mxu0
    %1269 = vmatpush.msra.mxu0 0.0
    %1270 = vmatpush.msra.mxu0 0.0
    %1271 = vmatpush.msra.mxu0 0.0
    %1272 = vmatpush.msra.mxu0 0.0
    %1273 = vmatpush.msra.mxu0 0.0
    %1274 = vmatpush.msra.mxu0 0.0
    %1275 = vmatpush.msra.mxu0 0.0
    %1276 = vmatpush.msra.mxu0 0.0
    %1277 = vmatpush.msra.mxu0 0.0
    %1278 = vmatpush.msra.mxu0 0.0
    %1279 = vmatpush.msra.mxu0 0.0
    %1280 = vmatpush.msra.mxu0 0.0
    %1281 = vmatpush.msra.mxu0 0.0
    %1282 = vmatpush.msra.mxu0 0.0
    %1283 = vmatpush.msra.mxu0 %v1247
    %1284 = vmatpush.msra.mxu0 %v1239
    %1285 = vmatmul.f32.gmra.mxu0 %v1244
    %v1286 = vpop.f32.mrf.mxu0
    %v1287 = vadd.f32 %v1267, %v1286
    %1288 = vdwg.mxu0
    %v1289 = vadd.f32 %v1221, %v1287
    %s1290 = scalar_lea.vmem %s7, 432
    %v1291 = vld [vmem:[%s1290] sm:$0xff]
    %v1292 = vld [vmem:[%s1290 + $0x8] sm:$0xff]
    %v1293 = vld [vmem:[%s1290 + $0x10] sm:$0xff]
    %v1294 = vld [vmem:[%s1290 + $0x18] sm:$0xff]
    %v1295 = vld [vmem:[%s1290 + $0x20] sm:$0xff]
    %v1296 = vld [vmem:[%s1290 + $0x28] sm:$0xff]
    %v1297 = vld [vmem:[%s1290 + $0x30] sm:$0xff]
    %v1298 = vld [vmem:[%s1290 + $0x38] sm:$0xff]
    %v1299 = vld [vmem:[%s1290 + $0x40] sm:$0xff]
    %v1300 = vld [vmem:[%s1290 + $0x48] sm:$0xff]
    %v1301 = vld [vmem:[%s1290 + $0x50] sm:$0xff]
    %v1302 = vld [vmem:[%s1290 + $0x58] sm:$0xff]
    %v1303 = vld [vmem:[%s1290 + $0x60] sm:$0xff]
    %v1304 = vld [vmem:[%s1290 + $0x68] sm:$0xff]
    %v1305 = vld [vmem:[%s1290 + $0x70] sm:$0xff]
    %v1306 = vld [vmem:[%s1290 + $0x78] sm:$0xff]
    %v1307 = vld [vmem:[%s1290 + $0x80] sm:$0xff]
    %v1308 = vld [vmem:[%s1290 + $0x88] sm:$0xf]
    %v1309 = vrot.slane %v1084, 6
    %v1310 = vrot.slane %v1085, 6
    %v1312 = vsel %vm1105, %v1310, 0
    %v1315 = vsel %vm73, %v1308, 0
    %1317 = vmatpush.msra.mxu0 %v1306
    %1318 = vmatpush.msra.mxu0 %v1305
    %1319 = vmatpush.msra.mxu0 %v1304
    %1320 = vmatpush.msra.mxu0 %v1303
    %1321 = vmatpush.msra.mxu0 %v1302
    %1322 = vmatpush.msra.mxu0 %v1301
    %1323 = vmatpush.msra.mxu0 %v1300
    %1324 = vmatpush.msra.mxu0 %v1299
    %1325 = vmatpush.msra.mxu0 %v1298
    %1326 = vmatpush.msra.mxu0 %v1297
    %1327 = vmatpush.msra.mxu0 %v1296
    %1328 = vmatpush.msra.mxu0 %v1295
    %1329 = vmatpush.msra.mxu0 %v1294
    %1330 = vmatpush.msra.mxu0 %v1293
    %1331 = vmatpush.msra.mxu0 %v1292
    %1332 = vmatpush.msra.mxu0 %v1291
    %1333 = vmatmul.f32.gmra.mxu0 %v1309
    %v1334 = vpop.f32.mrf.mxu0
    %v1335 = vadd.f32 0.0, %v1334
    %1336 = vdwg.mxu0
    %1337 = vmatpush.msra.mxu0 0.0
    %1338 = vmatpush.msra.mxu0 0.0
    %1339 = vmatpush.msra.mxu0 0.0
    %1340 = vmatpush.msra.mxu0 0.0
    %1341 = vmatpush.msra.mxu0 0.0
    %1342 = vmatpush.msra.mxu0 0.0
    %1343 = vmatpush.msra.mxu0 0.0
    %1344 = vmatpush.msra.mxu0 0.0
    %1345 = vmatpush.msra.mxu0 0.0
    %1346 = vmatpush.msra.mxu0 0.0
    %1347 = vmatpush.msra.mxu0 0.0
    %1348 = vmatpush.msra.mxu0 0.0
    %1349 = vmatpush.msra.mxu0 0.0
    %1350 = vmatpush.msra.mxu0 0.0
    %1351 = vmatpush.msra.mxu0 %v1315
    %1352 = vmatpush.msra.mxu0 %v1307
    %1353 = vmatmul.f32.gmra.mxu0 %v1312
    %v1354 = vpop.f32.mrf.mxu0
    %v1355 = vadd.f32 %v1335, %v1354
    %1356 = vdwg.mxu0
    %v1357 = vadd.f32 %v1289, %v1355
    %s1358 = scalar_lea.vmem %s0, 32
    %v1359 = vld [vmem:[%s1358] sm:$0xff]
    %v1360 = vld [vmem:[%s1358 + $0x8] sm:$0xff]
    %v1361 = vld [vmem:[%s1358 + $0x10] sm:$0xff]
    %v1362 = vld [vmem:[%s1358 + $0x18] sm:$0xf]
    %v1367 = vrot.slane %v1359, 1
    %v1368 = vrot.slane %v1360, 1
    %v1369 = vsel %vm58, %v1367, %v1368
    %v1370 = vrot.slane %v1361, 1
    %v1371 = vsel %vm58, %v1368, %v1370
    %v1372 = vrot.slane %v1362, 1
    %v1373 = vsel %vm58, %v1370, %v1372
    %v1374 = vsel %vm66, %v1369, 0
    %v1376 = vsel %vm66, %v1371, 0
    %v1378 = vsel %vm66, %v1373, 0
    %1380 = vmatpush.msra.mxu0 0.0
    %1381 = vmatpush.msra.mxu0 0.0
    %1382 = vmatpush.msra.mxu0 0.0
    %1383 = vmatpush.msra.mxu0 0.0
    %1384 = vmatpush.msra.mxu0 0.0
    %1385 = vmatpush.msra.mxu0 0.0
    %1386 = vmatpush.msra.mxu0 0.0
    %1387 = vmatpush.msra.mxu0 0.0
    %1388 = vmatpush.msra.mxu0 0.0
    %1389 = vmatpush.msra.mxu0 0.0
    %1390 = vmatpush.msra.mxu0 0.0
    %1391 = vmatpush.msra.mxu0 0.0
    %1392 = vmatpush.msra.mxu0 %v75
    %1393 = vmatpush.msra.mxu0 %v50
    %1394 = vmatpush.msra.mxu0 %v48
    %1395 = vmatpush.msra.mxu0 %v46
    %1396 = vmatmul.f32.gmra.mxu0 %v1374
    %v1397 = vpop.f32.mrf.mxu0
    %v1398 = vadd.f32 0.0, %v1397
    %1399 = vmatmul.f32.gmra.mxu0 %v1376
    %v1400 = vpop.f32.mrf.mxu0
    %v1401 = vadd.f32 0.0, %v1400
    %1402 = vmatmul.f32.gmra.mxu0 %v1378
    %v1403 = vpop.f32.mrf.mxu0
    %v1404 = vadd.f32 0.0, %v1403
    %1405 = vdwg.mxu0
    %1406 = vmatpush.msra.mxu0 0.0
    %1407 = vmatpush.msra.mxu0 0.0
    %1408 = vmatpush.msra.mxu0 0.0
    %1409 = vmatpush.msra.mxu0 0.0
    %1410 = vmatpush.msra.mxu0 0.0
    %1411 = vmatpush.msra.mxu0 0.0
    %1412 = vmatpush.msra.mxu0 0.0
    %1413 = vmatpush.msra.mxu0 0.0
    %1414 = vmatpush.msra.mxu0 0.0
    %1415 = vmatpush.msra.mxu0 0.0
    %1416 = vmatpush.msra.mxu0 0.0
    %1417 = vmatpush.msra.mxu0 0.0
    %1418 = vmatpush.msra.mxu0 %v78
    %1419 = vmatpush.msra.mxu0 %v51
    %1420 = vmatpush.msra.mxu0 %v49
    %1421 = vmatpush.msra.mxu0 %v47
    %1422 = vmatmul.f32.gmra.mxu0 %v1374
    %v1423 = vpop.f32.mrf.mxu0
    %v1424 = vadd.f32 0.0, %v1423
    %1425 = vmatmul.f32.gmra.mxu0 %v1376
    %v1426 = vpop.f32.mrf.mxu0
    %v1427 = vadd.f32 0.0, %v1426
    %1428 = vmatmul.f32.gmra.mxu0 %v1378
    %v1429 = vpop.f32.mrf.mxu0
    %v1430 = vadd.f32 0.0, %v1429
    %1431 = vdwg.mxu0
    %v1432 = vsel %vm66, %v1359, 0
    %v1434 = vsel %vm66, %v1360, 0
    %v1436 = vsel %vm66, %v1361, 0
    %1438 = vmatpush.msra.mxu0 0.0
    %1439 = vmatpush.msra.mxu0 0.0
    %1440 = vmatpush.msra.mxu0 0.0
    %1441 = vmatpush.msra.mxu0 0.0
    %1442 = vmatpush.msra.mxu0 0.0
    %1443 = vmatpush.msra.mxu0 0.0
    %1444 = vmatpush.msra.mxu0 0.0
    %1445 = vmatpush.msra.mxu0 0.0
    %1446 = vmatpush.msra.mxu0 0.0
    %1447 = vmatpush.msra.mxu0 0.0
    %1448 = vmatpush.msra.mxu0 0.0
    %1449 = vmatpush.msra.mxu0 0.0
    %1450 = vmatpush.msra.mxu0 %v139
    %1451 = vmatpush.msra.mxu0 %v41
    %1452 = vmatpush.msra.mxu0 %v39
    %1453 = vmatpush.msra.mxu0 %v37
    %1454 = vmatmul.f32.gmra.mxu0 %v1432
    %v1455 = vpop.f32.mrf.mxu0
    %v1456 = vadd.f32 %v1398, %v1455
    %1457 = vmatmul.f32.gmra.mxu0 %v1434
    %v1458 = vpop.f32.mrf.mxu0
    %v1459 = vadd.f32 %v1401, %v1458
    %1460 = vmatmul.f32.gmra.mxu0 %v1436
    %v1461 = vpop.f32.mrf.mxu0
    %v1462 = vadd.f32 %v1404, %v1461
    %1463 = vdwg.mxu0
    %1464 = vmatpush.msra.mxu0 0.0
    %1465 = vmatpush.msra.mxu0 0.0
    %1466 = vmatpush.msra.mxu0 0.0
    %1467 = vmatpush.msra.mxu0 0.0
    %1468 = vmatpush.msra.mxu0 0.0
    %1469 = vmatpush.msra.mxu0 0.0
    %1470 = vmatpush.msra.mxu0 0.0
    %1471 = vmatpush.msra.mxu0 0.0
    %1472 = vmatpush.msra.mxu0 0.0
    %1473 = vmatpush.msra.mxu0 0.0
    %1474 = vmatpush.msra.mxu0 0.0
    %1475 = vmatpush.msra.mxu0 0.0
    %1476 = vmatpush.msra.mxu0 %v142
    %1477 = vmatpush.msra.mxu0 %v42
    %1478 = vmatpush.msra.mxu0 %v40
    %1479 = vmatpush.msra.mxu0 %v38
    %1480 = vmatmul.f32.gmra.mxu0 %v1432
    %v1481 = vpop.f32.mrf.mxu0
    %v1482 = vadd.f32 %v1424, %v1481
    %1483 = vmatmul.f32.gmra.mxu0 %v1434
    %v1484 = vpop.f32.mrf.mxu0
    %v1485 = vadd.f32 %v1427, %v1484
    %1486 = vmatmul.f32.gmra.mxu0 %v1436
    %v1487 = vpop.f32.mrf.mxu0
    %v1488 = vadd.f32 %v1430, %v1487
    %1489 = vdwg.mxu0
    %v1490 = vrot.slane %v1359, 2
    %v1491 = vrot.slane %v1360, 2
    %v1492 = vsel %vm205, %v1490, %v1491
    %v1493 = vrot.slane %v1361, 2
    %v1494 = vsel %vm205, %v1491, %v1493
    %v1495 = vrot.slane %v1362, 2
    %v1496 = vsel %vm205, %v1493, %v1495
    %v1497 = vsel %vm66, %v1492, 0
    %v1499 = vsel %vm66, %v1494, 0
    %v1501 = vsel %vm66, %v1496, 0
    %1503 = vmatpush.msra.mxu0 0.0
    %1504 = vmatpush.msra.mxu0 0.0
    %1505 = vmatpush.msra.mxu0 0.0
    %1506 = vmatpush.msra.mxu0 0.0
    %1507 = vmatpush.msra.mxu0 0.0
    %1508 = vmatpush.msra.mxu0 0.0
    %1509 = vmatpush.msra.mxu0 0.0
    %1510 = vmatpush.msra.mxu0 0.0
    %1511 = vmatpush.msra.mxu0 0.0
    %1512 = vmatpush.msra.mxu0 0.0
    %1513 = vmatpush.msra.mxu0 0.0
    %1514 = vmatpush.msra.mxu0 0.0
    %1515 = vmatpush.msra.mxu0 %v220
    %1516 = vmatpush.msra.mxu0 %v201
    %1517 = vmatpush.msra.mxu0 %v199
    %1518 = vmatpush.msra.mxu0 %v197
    %1519 = vmatmul.f32.gmra.mxu0 %v1497
    %v1520 = vpop.f32.mrf.mxu0
    %v1521 = vadd.f32 0.0, %v1520
    %1522 = vmatmul.f32.gmra.mxu0 %v1499
    %v1523 = vpop.f32.mrf.mxu0
    %v1524 = vadd.f32 0.0, %v1523
    %1525 = vmatmul.f32.gmra.mxu0 %v1501
    %v1526 = vpop.f32.mrf.mxu0
    %v1527 = vadd.f32 0.0, %v1526
    %1528 = vdwg.mxu0
    %1529 = vmatpush.msra.mxu0 0.0
    %1530 = vmatpush.msra.mxu0 0.0
    %1531 = vmatpush.msra.mxu0 0.0
    %1532 = vmatpush.msra.mxu0 0.0
    %1533 = vmatpush.msra.mxu0 0.0
    %1534 = vmatpush.msra.mxu0 0.0
    %1535 = vmatpush.msra.mxu0 0.0
    %1536 = vmatpush.msra.mxu0 0.0
    %1537 = vmatpush.msra.mxu0 0.0
    %1538 = vmatpush.msra.mxu0 0.0
    %1539 = vmatpush.msra.mxu0 0.0
    %1540 = vmatpush.msra.mxu0 0.0
    %1541 = vmatpush.msra.mxu0 %v223
    %1542 = vmatpush.msra.mxu0 %v202
    %1543 = vmatpush.msra.mxu0 %v200
    %1544 = vmatpush.msra.mxu0 %v198
    %1545 = vmatmul.f32.gmra.mxu0 %v1497
    %v1546 = vpop.f32.mrf.mxu0
    %v1547 = vadd.f32 0.0, %v1546
    %1548 = vmatmul.f32.gmra.mxu0 %v1499
    %v1549 = vpop.f32.mrf.mxu0
    %v1550 = vadd.f32 0.0, %v1549
    %1551 = vmatmul.f32.gmra.mxu0 %v1501
    %v1552 = vpop.f32.mrf.mxu0
    %v1553 = vadd.f32 0.0, %v1552
    %1554 = vdwg.mxu0
    %v1555 = vadd.f32 %v1456, %v1521
    %v1556 = vadd.f32 %v1482, %v1547
    %v1557 = vadd.f32 %v1459, %v1524
    %v1558 = vadd.f32 %v1485, %v1550
    %v1559 = vadd.f32 %v1462, %v1527
    %v1560 = vadd.f32 %v1488, %v1553
    %v1561 = vrot.slane %v1359, 3
    %v1562 = vrot.slane %v1360, 3
    %v1563 = vsel %vm292, %v1561, %v1562
    %v1564 = vrot.slane %v1361, 3
    %v1565 = vsel %vm292, %v1562, %v1564
    %v1566 = vrot.slane %v1362, 3
    %v1567 = vsel %vm292, %v1564, %v1566
    %v1568 = vsel %vm66, %v1563, 0
    %v1570 = vsel %vm66, %v1565, 0
    %v1572 = vsel %vm66, %v1567, 0
    %1574 = vmatpush.msra.mxu0 0.0
    %1575 = vmatpush.msra.mxu0 0.0
    %1576 = vmatpush.msra.mxu0 0.0
    %1577 = vmatpush.msra.mxu0 0.0
    %1578 = vmatpush.msra.mxu0 0.0
    %1579 = vmatpush.msra.mxu0 0.0
    %1580 = vmatpush.msra.mxu0 0.0
    %1581 = vmatpush.msra.mxu0 0.0
    %1582 = vmatpush.msra.mxu0 0.0
    %1583 = vmatpush.msra.mxu0 0.0
    %1584 = vmatpush.msra.mxu0 0.0
    %1585 = vmatpush.msra.mxu0 0.0
    %1586 = vmatpush.msra.mxu0 %v307
    %1587 = vmatpush.msra.mxu0 %v288
    %1588 = vmatpush.msra.mxu0 %v286
    %1589 = vmatpush.msra.mxu0 %v284
    %1590 = vmatmul.f32.gmra.mxu0 %v1568
    %v1591 = vpop.f32.mrf.mxu0
    %v1592 = vadd.f32 0.0, %v1591
    %1593 = vmatmul.f32.gmra.mxu0 %v1570
    %v1594 = vpop.f32.mrf.mxu0
    %v1595 = vadd.f32 0.0, %v1594
    %1596 = vmatmul.f32.gmra.mxu0 %v1572
    %v1597 = vpop.f32.mrf.mxu0
    %v1598 = vadd.f32 0.0, %v1597
    %1599 = vdwg.mxu0
    %1600 = vmatpush.msra.mxu0 0.0
    %1601 = vmatpush.msra.mxu0 0.0
    %1602 = vmatpush.msra.mxu0 0.0
    %1603 = vmatpush.msra.mxu0 0.0
    %1604 = vmatpush.msra.mxu0 0.0
    %1605 = vmatpush.msra.mxu0 0.0
    %1606 = vmatpush.msra.mxu0 0.0
    %1607 = vmatpush.msra.mxu0 0.0
    %1608 = vmatpush.msra.mxu0 0.0
    %1609 = vmatpush.msra.mxu0 0.0
    %1610 = vmatpush.msra.mxu0 0.0
    %1611 = vmatpush.msra.mxu0 0.0
    %1612 = vmatpush.msra.mxu0 %v310
    %1613 = vmatpush.msra.mxu0 %v289
    %1614 = vmatpush.msra.mxu0 %v287
    %1615 = vmatpush.msra.mxu0 %v285
    %1616 = vmatmul.f32.gmra.mxu0 %v1568
    %v1617 = vpop.f32.mrf.mxu0
    %v1618 = vadd.f32 0.0, %v1617
    %1619 = vmatmul.f32.gmra.mxu0 %v1570
    %v1620 = vpop.f32.mrf.mxu0
    %v1621 = vadd.f32 0.0, %v1620
    %1622 = vmatmul.f32.gmra.mxu0 %v1572
    %v1623 = vpop.f32.mrf.mxu0
    %v1624 = vadd.f32 0.0, %v1623
    %1625 = vdwg.mxu0
    %v1626 = vadd.f32 %v1555, %v1592
    %v1627 = vadd.f32 %v1556, %v1618
    %v1628 = vadd.f32 %v1557, %v1595
    %v1629 = vadd.f32 %v1558, %v1621
    %v1630 = vadd.f32 %v1559, %v1598
    %v1631 = vadd.f32 %v1560, %v1624
    %v1632 = vrot.slane %v1359, 4
    %v1633 = vrot.slane %v1360, 4
    %v1634 = vsel %vm73, %v1632, %v1633
    %v1635 = vrot.slane %v1361, 4
    %v1636 = vsel %vm73, %v1633, %v1635
    %v1637 = vrot.slane %v1362, 4
    %v1638 = vsel %vm73, %v1635, %v1637
    %v1639 = vsel %vm66, %v1634, 0
    %v1641 = vsel %vm66, %v1636, 0
    %v1643 = vsel %vm66, %v1638, 0
    %1645 = vmatpush.msra.mxu0 0.0
    %1646 = vmatpush.msra.mxu0 0.0
    %1647 = vmatpush.msra.mxu0 0.0
    %1648 = vmatpush.msra.mxu0 0.0
    %1649 = vmatpush.msra.mxu0 0.0
    %1650 = vmatpush.msra.mxu0 0.0
    %1651 = vmatpush.msra.mxu0 0.0
    %1652 = vmatpush.msra.mxu0 0.0
    %1653 = vmatpush.msra.mxu0 0.0
    %1654 = vmatpush.msra.mxu0 0.0
    %1655 = vmatpush.msra.mxu0 0.0
    %1656 = vmatpush.msra.mxu0 0.0
    %1657 = vmatpush.msra.mxu0 %v393
    %1658 = vmatpush.msra.mxu0 %v375
    %1659 = vmatpush.msra.mxu0 %v373
    %1660 = vmatpush.msra.mxu0 %v371
    %1661 = vmatmul.f32.gmra.mxu0 %v1639
    %v1662 = vpop.f32.mrf.mxu0
    %v1663 = vadd.f32 0.0, %v1662
    %1664 = vmatmul.f32.gmra.mxu0 %v1641
    %v1665 = vpop.f32.mrf.mxu0
    %v1666 = vadd.f32 0.0, %v1665
    %1667 = vmatmul.f32.gmra.mxu0 %v1643
    %v1668 = vpop.f32.mrf.mxu0
    %v1669 = vadd.f32 0.0, %v1668
    %1670 = vdwg.mxu0
    %1671 = vmatpush.msra.mxu0 0.0
    %1672 = vmatpush.msra.mxu0 0.0
    %1673 = vmatpush.msra.mxu0 0.0
    %1674 = vmatpush.msra.mxu0 0.0
    %1675 = vmatpush.msra.mxu0 0.0
    %1676 = vmatpush.msra.mxu0 0.0
    %1677 = vmatpush.msra.mxu0 0.0
    %1678 = vmatpush.msra.mxu0 0.0
    %1679 = vmatpush.msra.mxu0 0.0
    %1680 = vmatpush.msra.mxu0 0.0
    %1681 = vmatpush.msra.mxu0 0.0
    %1682 = vmatpush.msra.mxu0 0.0
    %1683 = vmatpush.msra.mxu0 %v396
    %1684 = vmatpush.msra.mxu0 %v376
    %1685 = vmatpush.msra.mxu0 %v374
    %1686 = vmatpush.msra.mxu0 %v372
    %1687 = vmatmul.f32.gmra.mxu0 %v1639
    %v1688 = vpop.f32.mrf.mxu0
    %v1689 = vadd.f32 0.0, %v1688
    %1690 = vmatmul.f32.gmra.mxu0 %v1641
    %v1691 = vpop.f32.mrf.mxu0
    %v1692 = vadd.f32 0.0, %v1691
    %1693 = vmatmul.f32.gmra.mxu0 %v1643
    %v1694 = vpop.f32.mrf.mxu0
    %v1695 = vadd.f32 0.0, %v1694
    %1696 = vdwg.mxu0
    %v1697 = vadd.f32 %v1626, %v1663
    %v1698 = vadd.f32 %v1627, %v1689
    %v1699 = vadd.f32 %v1628, %v1666
    %v1700 = vadd.f32 %v1629, %v1692
    %v1701 = vadd.f32 %v1630, %v1669
    %v1702 = vadd.f32 %v1631, %v1695
    %v1703 = vadd.f32 %v1697, %v458
    %v1704 = vadd.f32 %v1698, %v459
    %v1705 = vadd.f32 %v1699, %v458
    %v1706 = vadd.f32 %v1700, %v459
    %v1707 = vadd.f32 %v1701, %v458
    %v1708 = vadd.f32 %v1702, %v459
    %v1709 = vmax.f32 %v1703, 0.0
    %v1710 = vmax.f32 %v1704, 0.0
    %v1711 = vmax.f32 %v1705, 0.0
    %v1712 = vmax.f32 %v1706, 0.0
    %v1713 = vmax.f32 %v1707, 0.0
    %v1714 = vmax.f32 %v1708, 0.0
    %v1721 = vrot.slane %v1709, 1
    %v1722 = vrot.slane %v1711, 1
    %v1723 = vsel %vm58, %v1721, %v1722
    %v1724 = vrot.slane %v1710, 1
    %v1725 = vrot.slane %v1712, 1
    %v1726 = vsel %vm58, %v1724, %v1725
    %v1727 = vrot.slane %v1713, 1
    %v1728 = vsel %vm58, %v1722, %v1727
    %v1729 = vrot.slane %v1714, 1
    %v1730 = vsel %vm58, %v1725, %v1729
    %v1737 = vmax.f32 %v1709, %v1723
    %v1738 = vmax.f32 %v1710, %v1726
    %v1739 = vmax.f32 %v1711, %v1728
    %v1740 = vmax.f32 %v1712, %v1730
    %v1741 = vmax.f32 %v1713, %v1727
    %v1742 = vmax.f32 %v1714, %v1729
    %v1744 = vsel %vm58, %v1741, 0
    %v1747 = vsel %vm58, %v1742, 0
    %1749 = vmatpush.msra.mxu0 0.0
    %1750 = vmatpush.msra.mxu0 0.0
    %1751 = vmatpush.msra.mxu0 0.0
    %1752 = vmatpush.msra.mxu0 0.0
    %1753 = vmatpush.msra.mxu0 0.0
    %1754 = vmatpush.msra.mxu0 0.0
    %1755 = vmatpush.msra.mxu0 0.0
    %1756 = vmatpush.msra.mxu0 0.0
    %1757 = vmatpush.msra.mxu0 0.0
    %1758 = vmatpush.msra.mxu0 0.0
    %1759 = vmatpush.msra.mxu0 0.0
    %1760 = vmatpush.msra.mxu0 0.0
    %1761 = vmatpush.msra.mxu0 0.0
    %1762 = vmatpush.msra.mxu0 %v1744
    %1763 = vmatpush.msra.mxu0 %v1739
    %1764 = vmatpush.msra.mxu0 %v1737
    %1765 = vmatmul.f32.gmra.mxu0 %v506
    %v1766 = vpop.f32.mrf.mxu0
    %v1767 = vadd.f32 0.0, %v1766
    %1768 = vmatmul.f32.gmra.mxu0 %v509
    %v1769 = vpop.f32.mrf.mxu0
    %v1770 = vadd.f32 0.0, %v1769
    %1771 = vdwg.mxu0
    %1772 = vmatpush.msra.mxu0 0.0
    %1773 = vmatpush.msra.mxu0 0.0
    %1774 = vmatpush.msra.mxu0 0.0
    %1775 = vmatpush.msra.mxu0 0.0
    %1776 = vmatpush.msra.mxu0 0.0
    %1777 = vmatpush.msra.mxu0 0.0
    %1778 = vmatpush.msra.mxu0 0.0
    %1779 = vmatpush.msra.mxu0 0.0
    %1780 = vmatpush.msra.mxu0 0.0
    %1781 = vmatpush.msra.mxu0 0.0
    %1782 = vmatpush.msra.mxu0 0.0
    %1783 = vmatpush.msra.mxu0 0.0
    %1784 = vmatpush.msra.mxu0 0.0
    %1785 = vmatpush.msra.mxu0 %v1747
    %1786 = vmatpush.msra.mxu0 %v1740
    %1787 = vmatpush.msra.mxu0 %v1738
    %1788 = vmatmul.f32.gmra.mxu0 %v506
    %v1789 = vpop.f32.mrf.mxu0
    %v1790 = vadd.f32 0.0, %v1789
    %1791 = vmatmul.f32.gmra.mxu0 %v509
    %v1792 = vpop.f32.mrf.mxu0
    %v1793 = vadd.f32 0.0, %v1792
    %1794 = vdwg.mxu0
    %1799 = vrot.lane.b32.xlu0 %v1767, 118
    %v1800 = vpop.permute.xlu0 %1799
    %1801 = vrot.lane.b32.xlu0 %v1790, 118
    %v1802 = vpop.permute.xlu0 %1801
    %1803 = vrot.lane.b32.xlu0 %v1770, 118
    %v1804 = vpop.permute.xlu0 %1803
    %1805 = vrot.lane.b32.xlu0 %v1793, 118
    %v1806 = vpop.permute.xlu0 %1805
    %v1807 = vsel %vm575, %v1800, %v1802
    %v1808 = vsel %vm575, %v1804, %v1806
    %v1813 = vmax.f32 %v1767, %v1807
    %v1814 = vmax.f32 %v1790, %v1802
    %v1815 = vmax.f32 %v1770, %v1808
    %v1816 = vmax.f32 %v1793, %v1806
    %v1818 = vsel %vm615, %v1814, 0
    %v1821 = vsel %vm615, %v1816, 0
    %1823 = vmatpush.msra.mxu0 %v601
    %1824 = vmatpush.msra.mxu0 %v600
    %1825 = vmatpush.msra.mxu0 %v599
    %1826 = vmatpush.msra.mxu0 %v598
    %1827 = vmatpush.msra.mxu0 %v597
    %1828 = vmatpush.msra.mxu0 %v596
    %1829 = vmatpush.msra.mxu0 %v595
    %1830 = vmatpush.msra.mxu0 %v594
    %1831 = vmatpush.msra.mxu0 %v593
    %1832 = vmatpush.msra.mxu0 %v592
    %1833 = vmatpush.msra.mxu0 %v591
    %1834 = vmatpush.msra.mxu0 %v590
    %1835 = vmatpush.msra.mxu0 %v589
    %1836 = vmatpush.msra.mxu0 %v588
    %1837 = vmatpush.msra.mxu0 %v587
    %1838 = vmatpush.msra.mxu0 %v586
    %1839 = vmatmul.f32.gmra.mxu0 %v1813
    %v1840 = vpop.f32.mrf.mxu0
    %v1841 = vadd.f32 0.0, %v1840
    %1842 = vmatmul.f32.gmra.mxu0 %v1815
    %v1843 = vpop.f32.mrf.mxu0
    %v1844 = vadd.f32 0.0, %v1843
    %1845 = vdwg.mxu0
    %1846 = vmatpush.msra.mxu0 0.0
    %1847 = vmatpush.msra.mxu0 0.0
    %1848 = vmatpush.msra.mxu0 0.0
    %1849 = vmatpush.msra.mxu0 %v623
    %1850 = vmatpush.msra.mxu0 %v613
    %1851 = vmatpush.msra.mxu0 %v612
    %1852 = vmatpush.msra.mxu0 %v611
    %1853 = vmatpush.msra.mxu0 %v610
    %1854 = vmatpush.msra.mxu0 %v609
    %1855 = vmatpush.msra.mxu0 %v608
    %1856 = vmatpush.msra.mxu0 %v607
    %1857 = vmatpush.msra.mxu0 %v606
    %1858 = vmatpush.msra.mxu0 %v605
    %1859 = vmatpush.msra.mxu0 %v604
    %1860 = vmatpush.msra.mxu0 %v603
    %1861 = vmatpush.msra.mxu0 %v602
    %1862 = vmatmul.f32.gmra.mxu0 %v1818
    %v1863 = vpop.f32.mrf.mxu0
    %v1864 = vadd.f32 %v1841, %v1863
    %1865 = vmatmul.f32.gmra.mxu0 %v1821
    %v1866 = vpop.f32.mrf.mxu0
    %v1867 = vadd.f32 %v1844, %v1866
    %1868 = vdwg.mxu0
    %v1871 = vrot.slane %v1864, 1
    %v1872 = vrot.slane %v1867, 1
    %v1873 = vsel %vm58, %v1871, %v1872
    %v1874 = vsel %vm737, %v1873, 0
    %1876 = vmatpush.msra.mxu0 0.0
    %1877 = vmatpush.msra.mxu0 %v730
    %1878 = vmatpush.msra.mxu0 %v728
    %1879 = vmatpush.msra.mxu0 %v726
    %1880 = vmatpush.msra.mxu0 %v724
    %1881 = vmatpush.msra.mxu0 %v722
    %1882 = vmatpush.msra.mxu0 %v720
    %1883 = vmatpush.msra.mxu0 %v718
    %1884 = vmatpush.msra.mxu0 %v716
    %1885 = vmatpush.msra.mxu0 %v714
    %1886 = vmatpush.msra.mxu0 %v712
    %1887 = vmatpush.msra.mxu0 %v710
    %1888 = vmatpush.msra.mxu0 %v708
    %1889 = vmatpush.msra.mxu0 %v706
    %1890 = vmatpush.msra.mxu0 %v704
    %1891 = vmatpush.msra.mxu0 %v702
    %1892 = vmatmul.f32.gmra.mxu0 %v1874
    %v1893 = vpop.f32.mrf.mxu0
    %v1894 = vadd.f32 0.0, %v1893
    %1895 = vdwg.mxu0
    %1896 = vmatpush.msra.mxu0 0.0
    %1897 = vmatpush.msra.mxu0 %v731
    %1898 = vmatpush.msra.mxu0 %v729
    %1899 = vmatpush.msra.mxu0 %v727
    %1900 = vmatpush.msra.mxu0 %v725
    %1901 = vmatpush.msra.mxu0 %v723
    %1902 = vmatpush.msra.mxu0 %v721
    %1903 = vmatpush.msra.mxu0 %v719
    %1904 = vmatpush.msra.mxu0 %v717
    %1905 = vmatpush.msra.mxu0 %v715
    %1906 = vmatpush.msra.mxu0 %v713
    %1907 = vmatpush.msra.mxu0 %v711
    %1908 = vmatpush.msra.mxu0 %v709
    %1909 = vmatpush.msra.mxu0 %v707
    %1910 = vmatpush.msra.mxu0 %v705
    %1911 = vmatpush.msra.mxu0 %v703
    %1912 = vmatmul.f32.gmra.mxu0 %v1874
    %v1913 = vpop.f32.mrf.mxu0
    %v1914 = vadd.f32 0.0, %v1913
    %1915 = vdwg.mxu0
    %v1916 = vsel %vm737, %v1864, 0
    %1918 = vmatpush.msra.mxu0 0.0
    %1919 = vmatpush.msra.mxu0 %v699
    %1920 = vmatpush.msra.mxu0 %v697
    %1921 = vmatpush.msra.mxu0 %v695
    %1922 = vmatpush.msra.mxu0 %v693
    %1923 = vmatpush.msra.mxu0 %v691
    %1924 = vmatpush.msra.mxu0 %v689
    %1925 = vmatpush.msra.mxu0 %v687
    %1926 = vmatpush.msra.mxu0 %v685
    %1927 = vmatpush.msra.mxu0 %v683
    %1928 = vmatpush.msra.mxu0 %v681
    %1929 = vmatpush.msra.mxu0 %v679
    %1930 = vmatpush.msra.mxu0 %v677
    %1931 = vmatpush.msra.mxu0 %v675
    %1932 = vmatpush.msra.mxu0 %v673
    %1933 = vmatpush.msra.mxu0 %v671
    %1934 = vmatmul.f32.gmra.mxu0 %v1916
    %v1935 = vpop.f32.mrf.mxu0
    %v1936 = vadd.f32 %v1894, %v1935
    %1937 = vdwg.mxu0
    %1938 = vmatpush.msra.mxu0 0.0
    %1939 = vmatpush.msra.mxu0 %v700
    %1940 = vmatpush.msra.mxu0 %v698
    %1941 = vmatpush.msra.mxu0 %v696
    %1942 = vmatpush.msra.mxu0 %v694
    %1943 = vmatpush.msra.mxu0 %v692
    %1944 = vmatpush.msra.mxu0 %v690
    %1945 = vmatpush.msra.mxu0 %v688
    %1946 = vmatpush.msra.mxu0 %v686
    %1947 = vmatpush.msra.mxu0 %v684
    %1948 = vmatpush.msra.mxu0 %v682
    %1949 = vmatpush.msra.mxu0 %v680
    %1950 = vmatpush.msra.mxu0 %v678
    %1951 = vmatpush.msra.mxu0 %v676
    %1952 = vmatpush.msra.mxu0 %v674
    %1953 = vmatpush.msra.mxu0 %v672
    %1954 = vmatmul.f32.gmra.mxu0 %v1916
    %v1955 = vpop.f32.mrf.mxu0
    %v1956 = vadd.f32 %v1914, %v1955
    %1957 = vdwg.mxu0
    %v1958 = vrot.slane %v1864, 2
    %v1959 = vrot.slane %v1867, 2
    %v1960 = vsel %vm205, %v1958, %v1959
    %v1961 = vsel %vm737, %v1960, 0
    %1963 = vmatpush.msra.mxu0 0.0
    %1964 = vmatpush.msra.mxu0 %v851
    %1965 = vmatpush.msra.mxu0 %v849
    %1966 = vmatpush.msra.mxu0 %v847
    %1967 = vmatpush.msra.mxu0 %v845
    %1968 = vmatpush.msra.mxu0 %v843
    %1969 = vmatpush.msra.mxu0 %v841
    %1970 = vmatpush.msra.mxu0 %v839
    %1971 = vmatpush.msra.mxu0 %v837
    %1972 = vmatpush.msra.mxu0 %v835
    %1973 = vmatpush.msra.mxu0 %v833
    %1974 = vmatpush.msra.mxu0 %v831
    %1975 = vmatpush.msra.mxu0 %v829
    %1976 = vmatpush.msra.mxu0 %v827
    %1977 = vmatpush.msra.mxu0 %v825
    %1978 = vmatpush.msra.mxu0 %v823
    %1979 = vmatmul.f32.gmra.mxu0 %v1961
    %v1980 = vpop.f32.mrf.mxu0
    %v1981 = vadd.f32 0.0, %v1980
    %1982 = vdwg.mxu0
    %1983 = vmatpush.msra.mxu0 0.0
    %1984 = vmatpush.msra.mxu0 %v852
    %1985 = vmatpush.msra.mxu0 %v850
    %1986 = vmatpush.msra.mxu0 %v848
    %1987 = vmatpush.msra.mxu0 %v846
    %1988 = vmatpush.msra.mxu0 %v844
    %1989 = vmatpush.msra.mxu0 %v842
    %1990 = vmatpush.msra.mxu0 %v840
    %1991 = vmatpush.msra.mxu0 %v838
    %1992 = vmatpush.msra.mxu0 %v836
    %1993 = vmatpush.msra.mxu0 %v834
    %1994 = vmatpush.msra.mxu0 %v832
    %1995 = vmatpush.msra.mxu0 %v830
    %1996 = vmatpush.msra.mxu0 %v828
    %1997 = vmatpush.msra.mxu0 %v826
    %1998 = vmatpush.msra.mxu0 %v824
    %1999 = vmatmul.f32.gmra.mxu0 %v1961
    %v2000 = vpop.f32.mrf.mxu0
    %v2001 = vadd.f32 0.0, %v2000
    %2002 = vdwg.mxu0
    %v2003 = vadd.f32 %v1936, %v1981
    %v2004 = vadd.f32 %v1956, %v2001
    %v2005 = vrot.slane %v1864, 3
    %v2006 = vrot.slane %v1867, 3
    %v2007 = vsel %vm292, %v2005, %v2006
    %v2008 = vsel %vm737, %v2007, 0
    %2010 = vmatpush.msra.mxu0 0.0
    %2011 = vmatpush.msra.mxu0 %v929
    %2012 = vmatpush.msra.mxu0 %v927
    %2013 = vmatpush.msra.mxu0 %v925
    %2014 = vmatpush.msra.mxu0 %v923
    %2015 = vmatpush.msra.mxu0 %v921
    %2016 = vmatpush.msra.mxu0 %v919
    %2017 = vmatpush.msra.mxu0 %v917
    %2018 = vmatpush.msra.mxu0 %v915
    %2019 = vmatpush.msra.mxu0 %v913
    %2020 = vmatpush.msra.mxu0 %v911
    %2021 = vmatpush.msra.mxu0 %v909
    %2022 = vmatpush.msra.mxu0 %v907
    %2023 = vmatpush.msra.mxu0 %v905
    %2024 = vmatpush.msra.mxu0 %v903
    %2025 = vmatpush.msra.mxu0 %v901
    %2026 = vmatmul.f32.gmra.mxu0 %v2008
    %v2027 = vpop.f32.mrf.mxu0
    %v2028 = vadd.f32 0.0, %v2027
    %2029 = vdwg.mxu0
    %2030 = vmatpush.msra.mxu0 0.0
    %2031 = vmatpush.msra.mxu0 %v930
    %2032 = vmatpush.msra.mxu0 %v928
    %2033 = vmatpush.msra.mxu0 %v926
    %2034 = vmatpush.msra.mxu0 %v924
    %2035 = vmatpush.msra.mxu0 %v922
    %2036 = vmatpush.msra.mxu0 %v920
    %2037 = vmatpush.msra.mxu0 %v918
    %2038 = vmatpush.msra.mxu0 %v916
    %2039 = vmatpush.msra.mxu0 %v914
    %2040 = vmatpush.msra.mxu0 %v912
    %2041 = vmatpush.msra.mxu0 %v910
    %2042 = vmatpush.msra.mxu0 %v908
    %2043 = vmatpush.msra.mxu0 %v906
    %2044 = vmatpush.msra.mxu0 %v904
    %2045 = vmatpush.msra.mxu0 %v902
    %2046 = vmatmul.f32.gmra.mxu0 %v2008
    %v2047 = vpop.f32.mrf.mxu0
    %v2048 = vadd.f32 0.0, %v2047
    %2049 = vdwg.mxu0
    %v2050 = vadd.f32 %v2003, %v2028
    %v2051 = vadd.f32 %v2004, %v2048
    %v2052 = vrot.slane %v1864, 4
    %v2053 = vrot.slane %v1867, 4
    %v2054 = vsel %vm73, %v2052, %v2053
    %v2055 = vsel %vm737, %v2054, 0
    %2057 = vmatpush.msra.mxu0 0.0
    %2058 = vmatpush.msra.mxu0 %v1007
    %2059 = vmatpush.msra.mxu0 %v1005
    %2060 = vmatpush.msra.mxu0 %v1003
    %2061 = vmatpush.msra.mxu0 %v1001
    %2062 = vmatpush.msra.mxu0 %v999
    %2063 = vmatpush.msra.mxu0 %v997
    %2064 = vmatpush.msra.mxu0 %v995
    %2065 = vmatpush.msra.mxu0 %v993
    %2066 = vmatpush.msra.mxu0 %v991
    %2067 = vmatpush.msra.mxu0 %v989
    %2068 = vmatpush.msra.mxu0 %v987
    %2069 = vmatpush.msra.mxu0 %v985
    %2070 = vmatpush.msra.mxu0 %v983
    %2071 = vmatpush.msra.mxu0 %v981
    %2072 = vmatpush.msra.mxu0 %v979
    %2073 = vmatmul.f32.gmra.mxu0 %v2055
    %v2074 = vpop.f32.mrf.mxu0
    %v2075 = vadd.f32 0.0, %v2074
    %2076 = vdwg.mxu0
    %2077 = vmatpush.msra.mxu0 0.0
    %2078 = vmatpush.msra.mxu0 %v1008
    %2079 = vmatpush.msra.mxu0 %v1006
    %2080 = vmatpush.msra.mxu0 %v1004
    %2081 = vmatpush.msra.mxu0 %v1002
    %2082 = vmatpush.msra.mxu0 %v1000
    %2083 = vmatpush.msra.mxu0 %v998
    %2084 = vmatpush.msra.mxu0 %v996
    %2085 = vmatpush.msra.mxu0 %v994
    %2086 = vmatpush.msra.mxu0 %v992
    %2087 = vmatpush.msra.mxu0 %v990
    %2088 = vmatpush.msra.mxu0 %v988
    %2089 = vmatpush.msra.mxu0 %v986
    %2090 = vmatpush.msra.mxu0 %v984
    %2091 = vmatpush.msra.mxu0 %v982
    %2092 = vmatpush.msra.mxu0 %v980
    %2093 = vmatmul.f32.gmra.mxu0 %v2055
    %v2094 = vpop.f32.mrf.mxu0
    %v2095 = vadd.f32 0.0, %v2094
    %2096 = vdwg.mxu0
    %v2097 = vadd.f32 %v2050, %v2075
    %v2098 = vadd.f32 %v2051, %v2095
    %v2099 = vadd.f32 %v2097, %v1058
    %v2100 = vadd.f32 %v2098, %v1059
    %v2101 = vmax.f32 %v2099, 0.0
    %v2102 = vmax.f32 %v2100, 0.0
    %v2105 = vrot.slane %v2101, 1
    %v2106 = vrot.slane %v2102, 1
    %v2109 = vmax.f32 %v2101, %v2105
    %v2110 = vmax.f32 %v2102, %v2106
    %2113 = vrot.lane.b32.xlu0 %v2109, 108
    %v2114 = vpop.permute.xlu0 %2113
    %2115 = vrot.lane.b32.xlu0 %v2110, 108
    %v2116 = vpop.permute.xlu0 %2115
    %v2117 = vsel %vm1080, %v2114, %v2116
    %v2120 = vmax.f32 %v2109, %v2117
    %v2121 = vmax.f32 %v2110, %v2116
    %v2123 = vsel %vm1105, %v2121, 0
    %2125 = vmatpush.msra.mxu0 %v1102
    %2126 = vmatpush.msra.mxu0 %v1101
    %2127 = vmatpush.msra.mxu0 %v1100
    %2128 = vmatpush.msra.mxu0 %v1099
    %2129 = vmatpush.msra.mxu0 %v1098
    %2130 = vmatpush.msra.mxu0 %v1097
    %2131 = vmatpush.msra.mxu0 %v1096
    %2132 = vmatpush.msra.mxu0 %v1095
    %2133 = vmatpush.msra.mxu0 %v1094
    %2134 = vmatpush.msra.mxu0 %v1093
    %2135 = vmatpush.msra.mxu0 %v1092
    %2136 = vmatpush.msra.mxu0 %v1091
    %2137 = vmatpush.msra.mxu0 %v1090
    %2138 = vmatpush.msra.mxu0 %v1089
    %2139 = vmatpush.msra.mxu0 %v1088
    %2140 = vmatpush.msra.mxu0 %v1087
    %2141 = vmatmul.f32.gmra.mxu0 %v2120
    %v2142 = vpop.f32.mrf.mxu0
    %v2143 = vadd.f32 0.0, %v2142
    %2144 = vdwg.mxu0
    %2145 = vmatpush.msra.mxu0 0.0
    %2146 = vmatpush.msra.mxu0 0.0
    %2147 = vmatpush.msra.mxu0 0.0
    %2148 = vmatpush.msra.mxu0 0.0
    %2149 = vmatpush.msra.mxu0 0.0
    %2150 = vmatpush.msra.mxu0 0.0
    %2151 = vmatpush.msra.mxu0 0.0
    %2152 = vmatpush.msra.mxu0 0.0
    %2153 = vmatpush.msra.mxu0 0.0
    %2154 = vmatpush.msra.mxu0 0.0
    %2155 = vmatpush.msra.mxu0 0.0
    %2156 = vmatpush.msra.mxu0 0.0
    %2157 = vmatpush.msra.mxu0 0.0
    %2158 = vmatpush.msra.mxu0 0.0
    %2159 = vmatpush.msra.mxu0 %v1110
    %2160 = vmatpush.msra.mxu0 %v1103
    %2161 = vmatmul.f32.gmra.mxu0 %v2123
    %v2162 = vpop.f32.mrf.mxu0
    %v2163 = vadd.f32 %v2143, %v2162
    %2164 = vdwg.mxu0
    %v2165 = vadd.f32 %v1086, %v2163
    %v2167 = vrot.slane %v2120, 2
    %v2168 = vrot.slane %v2121, 2
    %v2170 = vsel %vm1105, %v2168, 0
    %2172 = vmatpush.msra.mxu0 %v1169
    %2173 = vmatpush.msra.mxu0 %v1168
    %2174 = vmatpush.msra.mxu0 %v1167
    %2175 = vmatpush.msra.mxu0 %v1166
    %2176 = vmatpush.msra.mxu0 %v1165
    %2177 = vmatpush.msra.mxu0 %v1164
    %2178 = vmatpush.msra.mxu0 %v1163
    %2179 = vmatpush.msra.mxu0 %v1162
    %2180 = vmatpush.msra.mxu0 %v1161
    %2181 = vmatpush.msra.mxu0 %v1160
    %2182 = vmatpush.msra.mxu0 %v1159
    %2183 = vmatpush.msra.mxu0 %v1158
    %2184 = vmatpush.msra.mxu0 %v1157
    %2185 = vmatpush.msra.mxu0 %v1156
    %2186 = vmatpush.msra.mxu0 %v1155
    %2187 = vmatpush.msra.mxu0 %v1154
    %2188 = vmatmul.f32.gmra.mxu0 %v2167
    %v2189 = vpop.f32.mrf.mxu0
    %v2190 = vadd.f32 0.0, %v2189
    %2191 = vdwg.mxu0
    %2192 = vmatpush.msra.mxu0 0.0
    %2193 = vmatpush.msra.mxu0 0.0
    %2194 = vmatpush.msra.mxu0 0.0
    %2195 = vmatpush.msra.mxu0 0.0
    %2196 = vmatpush.msra.mxu0 0.0
    %2197 = vmatpush.msra.mxu0 0.0
    %2198 = vmatpush.msra.mxu0 0.0
    %2199 = vmatpush.msra.mxu0 0.0
    %2200 = vmatpush.msra.mxu0 0.0
    %2201 = vmatpush.msra.mxu0 0.0
    %2202 = vmatpush.msra.mxu0 0.0
    %2203 = vmatpush.msra.mxu0 0.0
    %2204 = vmatpush.msra.mxu0 0.0
    %2205 = vmatpush.msra.mxu0 0.0
    %2206 = vmatpush.msra.mxu0 %v1179
    %2207 = vmatpush.msra.mxu0 %v1170
    %2208 = vmatmul.f32.gmra.mxu0 %v2170
    %v2209 = vpop.f32.mrf.mxu0
    %v2210 = vadd.f32 %v2190, %v2209
    %2211 = vdwg.mxu0
    %v2212 = vadd.f32 %v2165, %v2210
    %v2213 = vrot.slane %v2120, 4
    %v2214 = vrot.slane %v2121, 4
    %v2216 = vsel %vm1105, %v2214, 0
    %2218 = vmatpush.msra.mxu0 %v1238
    %2219 = vmatpush.msra.mxu0 %v1237
    %2220 = vmatpush.msra.mxu0 %v1236
    %2221 = vmatpush.msra.mxu0 %v1235
    %2222 = vmatpush.msra.mxu0 %v1234
    %2223 = vmatpush.msra.mxu0 %v1233
    %2224 = vmatpush.msra.mxu0 %v1232
    %2225 = vmatpush.msra.mxu0 %v1231
    %2226 = vmatpush.msra.mxu0 %v1230
    %2227 = vmatpush.msra.mxu0 %v1229
    %2228 = vmatpush.msra.mxu0 %v1228
    %2229 = vmatpush.msra.mxu0 %v1227
    %2230 = vmatpush.msra.mxu0 %v1226
    %2231 = vmatpush.msra.mxu0 %v1225
    %2232 = vmatpush.msra.mxu0 %v1224
    %2233 = vmatpush.msra.mxu0 %v1223
    %2234 = vmatmul.f32.gmra.mxu0 %v2213
    %v2235 = vpop.f32.mrf.mxu0
    %v2236 = vadd.f32 0.0, %v2235
    %2237 = vdwg.mxu0
    %2238 = vmatpush.msra.mxu0 0.0
    %2239 = vmatpush.msra.mxu0 0.0
    %2240 = vmatpush.msra.mxu0 0.0
    %2241 = vmatpush.msra.mxu0 0.0
    %2242 = vmatpush.msra.mxu0 0.0
    %2243 = vmatpush.msra.mxu0 0.0
    %2244 = vmatpush.msra.mxu0 0.0
    %2245 = vmatpush.msra.mxu0 0.0
    %2246 = vmatpush.msra.mxu0 0.0
    %2247 = vmatpush.msra.mxu0 0.0
    %2248 = vmatpush.msra.mxu0 0.0
    %2249 = vmatpush.msra.mxu0 0.0
    %2250 = vmatpush.msra.mxu0 0.0
    %2251 = vmatpush.msra.mxu0 0.0
    %2252 = vmatpush.msra.mxu0 %v1247
    %2253 = vmatpush.msra.mxu0 %v1239
    %2254 = vmatmul.f32.gmra.mxu0 %v2216
    %v2255 = vpop.f32.mrf.mxu0
    %v2256 = vadd.f32 %v2236, %v2255
    %2257 = vdwg.mxu0
    %v2258 = vadd.f32 %v2212, %v2256
    %v2259 = vrot.slane %v2120, 6
    %v2260 = vrot.slane %v2121, 6
    %v2262 = vsel %vm1105, %v2260, 0
    %2264 = vmatpush.msra.mxu0 %v1306
    %2265 = vmatpush.msra.mxu0 %v1305
    %2266 = vmatpush.msra.mxu0 %v1304
    %2267 = vmatpush.msra.mxu0 %v1303
    %2268 = vmatpush.msra.mxu0 %v1302
    %2269 = vmatpush.msra.mxu0 %v1301
    %2270 = vmatpush.msra.mxu0 %v1300
    %2271 = vmatpush.msra.mxu0 %v1299
    %2272 = vmatpush.msra.mxu0 %v1298
    %2273 = vmatpush.msra.mxu0 %v1297
    %2274 = vmatpush.msra.mxu0 %v1296
    %2275 = vmatpush.msra.mxu0 %v1295
    %2276 = vmatpush.msra.mxu0 %v1294
    %2277 = vmatpush.msra.mxu0 %v1293
    %2278 = vmatpush.msra.mxu0 %v1292
    %2279 = vmatpush.msra.mxu0 %v1291
    %2280 = vmatmul.f32.gmra.mxu0 %v2259
    %v2281 = vpop.f32.mrf.mxu0
    %v2282 = vadd.f32 0.0, %v2281
    %2283 = vdwg.mxu0
    %2284 = vmatpush.msra.mxu0 0.0
    %2285 = vmatpush.msra.mxu0 0.0
    %2286 = vmatpush.msra.mxu0 0.0
    %2287 = vmatpush.msra.mxu0 0.0
    %2288 = vmatpush.msra.mxu0 0.0
    %2289 = vmatpush.msra.mxu0 0.0
    %2290 = vmatpush.msra.mxu0 0.0
    %2291 = vmatpush.msra.mxu0 0.0
    %2292 = vmatpush.msra.mxu0 0.0
    %2293 = vmatpush.msra.mxu0 0.0
    %2294 = vmatpush.msra.mxu0 0.0
    %2295 = vmatpush.msra.mxu0 0.0
    %2296 = vmatpush.msra.mxu0 0.0
    %2297 = vmatpush.msra.mxu0 0.0
    %2298 = vmatpush.msra.mxu0 %v1315
    %2299 = vmatpush.msra.mxu0 %v1307
    %2300 = vmatmul.f32.gmra.mxu0 %v2262
    %v2301 = vpop.f32.mrf.mxu0
    %v2302 = vadd.f32 %v2282, %v2301
    %2303 = vdwg.mxu0
    %v2304 = vadd.f32 %v2258, %v2302
    %v2306 = vperm.slane %v2304, 0
    %vm2308 = vcmask 1040384
    %v2309 = vsel %vm2308, %v1357, %v2306
    %vm2310 = vcmask 74752
    %2311 = vst.msk [vmem:[#allocation2] sm:$0x3] %vm2310, %v2309
    // Predicated region
    $region38: #{conv_mnist_forward.1} parent=1 // pred_check
      _
    $region39: #{conv_mnist_forward.1} parent=1 // pred_check_branch
      %2313 = sbr.rel (0) target = $region41
    $region40: #{conv_mnist_forward.1} parent=1 // pred_region
      %2315 = vsyncadd [#allocation3], 0
      %s2317 = sshll.u32 [#allocation2], 4
      %s2318 = int_to_ptr.vmem [resolvable:$true] %s2317
      %s2319 = sshll.u32 %s9, 4
      %s2320 = int_to_ptr.hbm [resolvable:$true] %s2319
      %2322 = dma.vmem_to_hbm [thread:$0]  %s2318, 32, %s2320, [#allocation3]
    $region41: #{conv_mnist_forward.1} parent=1 // pred_fallthru
      _
    // Predicated region
    $region42: #{conv_mnist_forward.1} parent=1 // pred_check
      _
    $region43: #{conv_mnist_forward.1} parent=1 // pred_check_branch
      %2324 = sbr.rel (0) target = $region45
    $region44: #{conv_mnist_forward.1} parent=1 // pred_region
      %2326 = dma.done [#allocation3], 32
    $region45: #{conv_mnist_forward.1} parent=1 // pred_fallthru
      _
    %2327 = vsyncpa [#allocation3], 1

</llo_original>
